<compile_context>
chip_gen: v7x
topology: tpu7x:2x2x1
jax: 0.10.0
libtpu: 0.0.40
codegen_flags: <defaults>
</compile_context>

<pallas_src>
import numpy as np
import jax
import jax.numpy as jnp
from jax.experimental import pallas as pl
from jax.experimental.pallas import tpu as pltpu

# ---- small, deterministic problem sizes consistent with the module -------------
NAGENTS     = 67          # (859 in the original; shrunk, and deliberately NOT tile-aligned)
BATCH       = 2
INPUT_DIM   = 16
HIDDEN_DIM  = 32
OUT_DIM     = 8
HEADS       = 4
HEAD_DIM    = HIDDEN_DIM // HEADS
S           = 5           # number of closest neighbours
BLOCK_N     = 128         # tile over the N = nagents*batch (token) axis -> lane axis
HEAD_PAD    = 8           # heads padded to one sublane tile (HEADS <= 8)
SCALE       = float(HEAD_DIM) ** 0.5
LEAKY_SLOPE = 0.01

assert HEADS <= HEAD_PAD and HIDDEN_DIM % HEADS == 0

# TODO(synk): the original module loads `cloest.npy`; here we build a deterministic
# synthetic closest-neighbour table instead (cyclic neighbours).


# =============================== Pallas kernel ==================================
def attention_policy_kernel(q0_ref, k_ref, v_ref,
                            wq_ref, bq_ref, wk_ref, bk_ref, wv_ref, bv_ref,
                            hs_ref, ex_ref, wfc_ref, bfc_ref, wl1_ref, bl1_ref,
                            out_ref):
    # ---- projections: ONE fused MXU matmul each for Q, K (all S), V (all S) ----
    q = jnp.dot(wq_ref[...], q0_ref[...], preferred_element_type=jnp.float32) + bq_ref[...]   # (32, tN)
    k = jnp.dot(wk_ref[...], k_ref[...],  preferred_element_type=jnp.float32) + bk_ref[...]   # (160, tN)
    v = jnp.dot(wv_ref[...], v_ref[...],  preferred_element_type=jnp.float32) + bv_ref[...]   # (160, tN)

    # ---- attention energies: segmented per-(neighbour, head) sum on the MXU ----
    # hs already carries the 1/sqrt(head_dim) scale; rows 4..7 of each 8-row block are zero.
    q_rep = jnp.concatenate([q] * S, axis=0)                                   # (160, tN)
    e = jnp.dot(hs_ref[...], q_rep * k, preferred_element_type=jnp.float32)    # (40, tN)

    # ---- softmax over the S neighbours: elementwise tree, lane-dense, no (tN,S) tensor ----
    e_s = [e[HEAD_PAD * s:HEAD_PAD * (s + 1), :] for s in range(S)]            # 5 x (8, tN)
    m = e_s[0]
    for s in range(1, S):
        m = jnp.maximum(m, e_s[s])
    p_s = [jnp.exp(x - m) for x in e_s]
    denom = p_s[0]
    for s in range(1, S):
        denom = denom + p_s[s]
    # exact reciprocal keeps the 1e-4 check; pl.reciprocal(denom, approx=True) is the
    # EUP-slot variant if looser tolerance is acceptable.
    inv = 1.0 / denom
    attn = jnp.concatenate([p * inv for p in p_s], axis=0)                     # (40, tN)

    # ---- context: expand per-head weights back to HIDDEN rows, weight V, sum over S ----
    a_exp = jnp.dot(ex_ref[...], attn, preferred_element_type=jnp.float32)     # (160, tN)
    pv = a_exp * v
    ctx = pv[0:HIDDEN_DIM, :]
    for s in range(1, S):
        ctx = ctx + pv[HIDDEN_DIM * s:HIDDEN_DIM * (s + 1), :]                 # (32, tN)

    # ---- SelfAttention.fc -> F.leaky_relu -> AttentionPolicy.l1 ----
    h1 = jnp.dot(wfc_ref[...], ctx, preferred_element_type=jnp.float32) + bfc_ref[...]
    act = jnp.where(h1 >= 0, h1, LEAKY_SLOPE * h1)
    out_ref[...] = jnp.dot(wl1_ref[...], act,
                           preferred_element_type=jnp.float32) + bl1_ref[...]  # (8, tN)


# =========================== parameter / layout packing =========================
def _block_diag_rep(w, n):
    """Place `w` n times on the block diagonal of an otherwise-zero matrix."""
    o, i = w.shape
    out = jnp.zeros((n * o, n * i), w.dtype)
    for s in range(n):
        out = out.at[s * o:(s + 1) * o, s * i:(s + 1) * i].set(w)
    return out


def _pack_params(params):
    """Repack (din,dout)/(1,dout) params into kernel-side (rows_out, rows_in) constants:
    block-diagonal fused K/V projections over the S neighbours, bias columns, and the
    constant head-sum (with 1/sqrt(head_dim) folded in) / head-expand matrices."""
    wq, bq, wk, bk, wv, bv, wfc, bfc, wl1, bl1 = params
    col = lambda b: jnp.reshape(b, (-1, 1)).astype(jnp.float32)

    head_of = np.repeat(np.arange(HEADS), HEAD_DIM)                  # (HIDDEN,)
    hs = np.zeros((HEAD_PAD, HIDDEN_DIM), np.float32)                # per-head segmented sum
    hs[head_of, np.arange(HIDDEN_DIM)] = 1.0 / SCALE
    ex = np.zeros((HIDDEN_DIM, HEAD_PAD), np.float32)                # head -> hidden expand
    ex[np.arange(HIDDEN_DIM), head_of] = 1.0

    return (
        wq.T.astype(jnp.float32), col(bq),                                        # (32,16), (32,1)
        _block_diag_rep(wk.T.astype(jnp.float32), S), jnp.tile(col(bk), (S, 1)),   # (160,80), (160,1)
        _block_diag_rep(wv.T.astype(jnp.float32), S), jnp.tile(col(bv), (S, 1)),   # (160,80), (160,1)
        _block_diag_rep(jnp.asarray(hs), S),                                       # (40,160)
        _block_diag_rep(jnp.asarray(ex), S),                                       # (160,40)
        wfc.T.astype(jnp.float32), col(bfc),                                       # (32,32), (32,1)
        wl1.T.astype(jnp.float32), col(bl1),                                       # (8,32),  (8,1)
    )


def attention_policy_pallas(q0, key, value, params, block_n=BLOCK_N):
    """q0: (N, D) query at neighbour position 0; key/value: (N, S, D)."""
    N = q0.shape[0]
    n_blocks = pl.cdiv(N, block_n)
    n_pad = n_blocks * block_n
    pad = n_pad - N

    # feature-major (lane-dense) slabs: token axis last -> maps onto the 128-lane axis
    q0_fm = jnp.pad(q0, ((0, pad), (0, 0))).T                                     # (D, Npad)
    k_fm = jnp.pad(key, ((0, pad), (0, 0), (0, 0))
                   ).transpose(1, 2, 0).reshape(S * INPUT_DIM, n_pad)             # (S*D, Npad)
    v_fm = jnp.pad(value, ((0, pad), (0, 0), (0, 0))
                   ).transpose(1, 2, 0).reshape(S * INPUT_DIM, n_pad)             # (S*D, Npad)

    packed = _pack_params(params)

    in_specs = [
        pl.BlockSpec((INPUT_DIM, block_n), lambda i: (0, i)),
        pl.BlockSpec((S * INPUT_DIM, block_n), lambda i: (0, i)),
        pl.BlockSpec((S * INPUT_DIM, block_n), lambda i: (0, i)),
    ] + [pl.BlockSpec(p.shape, lambda i: (0, 0)) for p in packed]

    out_fm = pl.pallas_call(
        attention_policy_kernel,
        grid=(n_blocks,),
        in_specs=in_specs,
        out_specs=pl.BlockSpec((OUT_DIM, block_n), lambda i: (0, i)),
        out_shape=jax.ShapeDtypeStruct((OUT_DIM, n_pad), jnp.float32),
        compiler_params=pltpu.CompilerParams(dimension_semantics=("parallel",)),
    )(q0_fm, k_fm, v_fm, *packed)

    return out_fm.T[:N]     # back to (N, OUT_DIM), drop the padded tail


# =============================== JAX glue (data prep) ===========================
def batchnorm_per_agent(obs, eps=1e-5):
    # training-mode BatchNorm1d(affine=False) applied independently per agent,
    # exactly like `self.query_bn(obs[a_i])` (query/key/value BNs are identical).
    mean = obs.mean(axis=1, keepdims=True)
    var = ((obs - mean) ** 2).mean(axis=1, keepdims=True)      # biased variance
    return (obs - mean) / jnp.sqrt(var + eps)


def build_qkv(obs, cloest):
    # obs: (nagents, B, D)  ->  (nagents*B, S, D), mirroring the torch stacking:
    # stack over agents -> (nagents, 5, B, D) -> permute(0,2,1,3) -> reshape(-1, 5, D)
    normed = batchnorm_per_agent(obs)
    gathered = normed[cloest]                                   # (nagents, S, B, D)
    gathered = jnp.transpose(gathered, (0, 2, 1, 3))            # (nagents, B, S, D)
    return gathered.reshape(-1, S, INPUT_DIM)                   # (N, S, D)


# =============================== pure-JAX reference ==============================
def reference_forward(query, key, value, params):
    wq, bq, wk, bk, wv, bv, wfc, bfc, wl1, bl1 = params
    N = query.shape[0]
    Q = query @ wq + bq
    K = key @ wk + bk
    V = value @ wv + bv

    def split(x):
        return x.reshape(N, S, HEADS, HEAD_DIM).transpose(0, 2, 1, 3)

    Qh, Kh, Vh = split(Q), split(K), split(V)
    energy = jnp.einsum('nhsd,nhtd->nhst', Qh, Kh) / SCALE
    attn = jax.nn.softmax(energy, axis=-1)
    x = jnp.einsum('nhst,nhtd->nhsd', attn, Vh)
    x = x.transpose(0, 2, 1, 3).reshape(N, S, HIDDEN_DIM)[:, 0, :]
    h1 = x @ wfc + bfc
    a = jnp.where(h1 >= 0, h1, LEAKY_SLOPE * h1)
    return a @ wl1 + bl1


# ====================================== main =====================================
if __name__ == "__main__":
    root = jax.random.PRNGKey(0)
    k_obs, k_wq, k_wk, k_wv, k_wfc, k_wl1, kb = jax.random.split(root, 7)
    kbq, kbk, kbv, kbfc, kbl1 = jax.random.split(kb, 5)

    # deterministic parameters (shapes follow SelfAttention / AttentionPolicy __init__)
    def lin(k, din, dout):
        return (jax.random.normal(k, (din, dout), jnp.float32) * 0.1)

    params = (
        lin(k_wq, INPUT_DIM, HIDDEN_DIM),   jax.random.normal(kbq,  (1, HIDDEN_DIM)) * 0.1,
        lin(k_wk, INPUT_DIM, HIDDEN_DIM),   jax.random.normal(kbk,  (1, HIDDEN_DIM)) * 0.1,
        lin(k_wv, INPUT_DIM, HIDDEN_DIM),   jax.random.normal(kbv,  (1, HIDDEN_DIM)) * 0.1,
        lin(k_wfc, HIDDEN_DIM, HIDDEN_DIM), jax.random.normal(kbfc, (1, HIDDEN_DIM)) * 0.1,
        lin(k_wl1, HIDDEN_DIM, OUT_DIM),    jax.random.normal(kbl1, (1, OUT_DIM)) * 0.1,
    )
    params = tuple(p.astype(jnp.float32) for p in params)

    # synthetic deterministic "closest neighbours" table (cyclic)
    cloest = jnp.asarray(
        np.stack([np.arange(a, a + S) % NAGENTS for a in range(NAGENTS)]), jnp.int32)

    # input observations: nagents lists of (batch, input_dim)
    obs = jax.random.normal(k_obs, (NAGENTS, BATCH, INPUT_DIM), jnp.float32)

    # BatchNorm + gather glue (query/key/value are built identically, per the module)
    query = build_qkv(obs, cloest)
    key = build_qkv(obs, cloest)
    value = build_qkv(obs, cloest)

    out = attention_policy_pallas(query[:, 0, :], key, value, params)
    out = jax.block_until_ready(out)

    ref = reference_forward(query, key, value, params)
    np.testing.assert_allclose(np.asarray(out), np.asarray(ref), rtol=1e-4, atol=1e-4)

    print("KERNEL_OK")
</pallas_src>

<mosaic_0001>
module attributes {stable_mosaic.version = 11 : i64} {
  func.func @attention_policy_kernel(%arg0: i32, %arg1: memref<16x128xf32, #tpu.memory_space<vmem>>, %arg2: memref<80x128xf32, #tpu.memory_space<vmem>>, %arg3: memref<80x128xf32, #tpu.memory_space<vmem>>, %arg4: memref<32x16xf32, #tpu.memory_space<vmem>>, %arg5: memref<32x1xf32, #tpu.memory_space<vmem>>, %arg6: memref<160x80xf32, #tpu.memory_space<vmem>>, %arg7: memref<160x1xf32, #tpu.memory_space<vmem>>, %arg8: memref<160x80xf32, #tpu.memory_space<vmem>>, %arg9: memref<160x1xf32, #tpu.memory_space<vmem>>, %arg10: memref<40x160xf32, #tpu.memory_space<vmem>>, %arg11: memref<160x40xf32, #tpu.memory_space<vmem>>, %arg12: memref<32x32xf32, #tpu.memory_space<vmem>>, %arg13: memref<32x1xf32, #tpu.memory_space<vmem>>, %arg14: memref<8x32xf32, #tpu.memory_space<vmem>>, %arg15: memref<8x1xf32, #tpu.memory_space<vmem>>, %arg16: memref<8x128xf32, #tpu.memory_space<vmem>>) attributes {dimension_semantics = [#tpu.dimension_semantics<parallel>], iteration_bounds = array<i64: 2>, scalar_prefetch = 0 : i64, scratch_operands = 0 : i64, tpu.core_type = #tpu.core_type<tc>, window_params = [{transform_indices = @transform_0, window_bounds = array<i64: 16, 128>}, {transform_indices = @transform_1, window_bounds = array<i64: 80, 128>}, {transform_indices = @transform_2, window_bounds = array<i64: 80, 128>}, {pipeline_mode = #tpu.pipeline_mode<synchronous>, transform_indices = @transform_3, window_bounds = array<i64: 32, 16>}, {pipeline_mode = #tpu.pipeline_mode<synchronous>, transform_indices = @transform_4, window_bounds = array<i64: 32, 1>}, {pipeline_mode = #tpu.pipeline_mode<synchronous>, transform_indices = @transform_5, window_bounds = array<i64: 160, 80>}, {pipeline_mode = #tpu.pipeline_mode<synchronous>, transform_indices = @transform_6, window_bounds = array<i64: 160, 1>}, {pipeline_mode = #tpu.pipeline_mode<synchronous>, transform_indices = @transform_7, window_bounds = array<i64: 160, 80>}, {pipeline_mode = #tpu.pipeline_mode<synchronous>, transform_indices = @transform_8, window_bounds = array<i64: 160, 1>}, {pipeline_mode = #tpu.pipeline_mode<synchronous>, transform_indices = @transform_9, window_bounds = array<i64: 40, 160>}, {pipeline_mode = #tpu.pipeline_mode<synchronous>, transform_indices = @transform_10, window_bounds = array<i64: 160, 40>}, {pipeline_mode = #tpu.pipeline_mode<synchronous>, transform_indices = @transform_11, window_bounds = array<i64: 32, 32>}, {pipeline_mode = #tpu.pipeline_mode<synchronous>, transform_indices = @transform_12, window_bounds = array<i64: 32, 1>}, {pipeline_mode = #tpu.pipeline_mode<synchronous>, transform_indices = @transform_13, window_bounds = array<i64: 8, 32>}, {pipeline_mode = #tpu.pipeline_mode<synchronous>, transform_indices = @transform_14, window_bounds = array<i64: 8, 1>}, {transform_indices = @transform_15, window_bounds = array<i64: 8, 128>}]} {
    %c0 = arith.constant 0 : index
    %c0_0 = arith.constant 0 : index
    %0 = vector.load %arg4[%c0, %c0_0] : memref<32x16xf32, #tpu.memory_space<vmem>>, vector<32x16xf32>
    %c0_1 = arith.constant 0 : index
    %c0_2 = arith.constant 0 : index
    %1 = vector.load %arg1[%c0_1, %c0_2] : memref<16x128xf32, #tpu.memory_space<vmem>>, vector<16x128xf32>
    %cst = arith.constant dense<0.000000e+00> : vector<32x128xf32>
    %2 = tpu.matmul %0, %1, %cst {dimension_numbers = #tpu.dot_dimension_numbers<[1], [0], [0], [1], [0, 0, 1, 1], [], []>} : vector<32x16xf32>, vector<16x128xf32>, vector<32x128xf32> -> vector<32x128xf32>
    %c0_3 = arith.constant 0 : index
    %c0_4 = arith.constant 0 : index
    %3 = vector.load %arg5[%c0_3, %c0_4] : memref<32x1xf32, #tpu.memory_space<vmem>>, vector<32x1xf32>
    %4 = vector.broadcast %3 : vector<32x1xf32> to vector<32x128xf32>
    %5 = arith.addf %2, %4 : vector<32x128xf32>
    %c0_5 = arith.constant 0 : index
    %c0_6 = arith.constant 0 : index
    %6 = vector.load %arg6[%c0_5, %c0_6] : memref<160x80xf32, #tpu.memory_space<vmem>>, vector<160x80xf32>
    %c0_7 = arith.constant 0 : index
    %c0_8 = arith.constant 0 : index
    %7 = vector.load %arg2[%c0_7, %c0_8] : memref<80x128xf32, #tpu.memory_space<vmem>>, vector<80x128xf32>
    %cst_9 = arith.constant dense<0.000000e+00> : vector<160x128xf32>
    %8 = tpu.matmul %6, %7, %cst_9 {dimension_numbers = #tpu.dot_dimension_numbers<[1], [0], [0], [1], [0, 0, 1, 1], [], []>} : vector<160x80xf32>, vector<80x128xf32>, vector<160x128xf32> -> vector<160x128xf32>
    %c0_10 = arith.constant 0 : index
    %c0_11 = arith.constant 0 : index
    %9 = vector.load %arg7[%c0_10, %c0_11] : memref<160x1xf32, #tpu.memory_space<vmem>>, vector<160x1xf32>
    %10 = vector.broadcast %9 : vector<160x1xf32> to vector<160x128xf32>
    %11 = arith.addf %8, %10 : vector<160x128xf32>
    %c0_12 = arith.constant 0 : index
    %c0_13 = arith.constant 0 : index
    %12 = vector.load %arg8[%c0_12, %c0_13] : memref<160x80xf32, #tpu.memory_space<vmem>>, vector<160x80xf32>
    %c0_14 = arith.constant 0 : index
    %c0_15 = arith.constant 0 : index
    %13 = vector.load %arg3[%c0_14, %c0_15] : memref<80x128xf32, #tpu.memory_space<vmem>>, vector<80x128xf32>
    %cst_16 = arith.constant dense<0.000000e+00> : vector<160x128xf32>
    %14 = tpu.matmul %12, %13, %cst_16 {dimension_numbers = #tpu.dot_dimension_numbers<[1], [0], [0], [1], [0, 0, 1, 1], [], []>} : vector<160x80xf32>, vector<80x128xf32>, vector<160x128xf32> -> vector<160x128xf32>
    %c0_17 = arith.constant 0 : index
    %c0_18 = arith.constant 0 : index
    %15 = vector.load %arg9[%c0_17, %c0_18] : memref<160x1xf32, #tpu.memory_space<vmem>>, vector<160x1xf32>
    %16 = vector.broadcast %15 : vector<160x1xf32> to vector<160x128xf32>
    %17 = arith.addf %14, %16 : vector<160x128xf32>
    %18 = tpu.concatenate %5, %5, %5, %5, %5 in 0 : vector<32x128xf32>, vector<32x128xf32>, vector<32x128xf32>, vector<32x128xf32>, vector<32x128xf32> -> vector<160x128xf32>
    %c0_19 = arith.constant 0 : index
    %c0_20 = arith.constant 0 : index
    %19 = vector.load %arg10[%c0_19, %c0_20] : memref<40x160xf32, #tpu.memory_space<vmem>>, vector<40x160xf32>
    %20 = arith.mulf %18, %11 : vector<160x128xf32>
    %cst_21 = arith.constant dense<0.000000e+00> : vector<40x128xf32>
    %21 = tpu.matmul %19, %20, %cst_21 {dimension_numbers = #tpu.dot_dimension_numbers<[1], [0], [0], [1], [0, 0, 1, 1], [], []>} : vector<40x160xf32>, vector<160x128xf32>, vector<40x128xf32> -> vector<40x128xf32>
    %22 = vector.extract_strided_slice %21 {offsets = [0, 0], sizes = [8, 128], strides = [1, 1]} : vector<40x128xf32> to vector<8x128xf32>
    %23 = vector.extract_strided_slice %21 {offsets = [8, 0], sizes = [8, 128], strides = [1, 1]} : vector<40x128xf32> to vector<8x128xf32>
    %24 = vector.extract_strided_slice %21 {offsets = [16, 0], sizes = [8, 128], strides = [1, 1]} : vector<40x128xf32> to vector<8x128xf32>
    %25 = vector.extract_strided_slice %21 {offsets = [24, 0], sizes = [8, 128], strides = [1, 1]} : vector<40x128xf32> to vector<8x128xf32>
    %26 = vector.extract_strided_slice %21 {offsets = [32, 0], sizes = [8, 128], strides = [1, 1]} : vector<40x128xf32> to vector<8x128xf32>
    %27 = arith.maximumf %22, %23 : vector<8x128xf32>
    %28 = arith.maximumf %27, %24 : vector<8x128xf32>
    %29 = arith.maximumf %28, %25 : vector<8x128xf32>
    %30 = arith.maximumf %29, %26 : vector<8x128xf32>
    %31 = arith.subf %22, %30 : vector<8x128xf32>
    %32 = math.exp %31 : vector<8x128xf32>
    %33 = arith.subf %23, %30 : vector<8x128xf32>
    %34 = math.exp %33 : vector<8x128xf32>
    %35 = arith.subf %24, %30 : vector<8x128xf32>
    %36 = math.exp %35 : vector<8x128xf32>
    %37 = arith.subf %25, %30 : vector<8x128xf32>
    %38 = math.exp %37 : vector<8x128xf32>
    %39 = arith.subf %26, %30 : vector<8x128xf32>
    %40 = math.exp %39 : vector<8x128xf32>
    %41 = arith.addf %32, %34 : vector<8x128xf32>
    %42 = arith.addf %41, %36 : vector<8x128xf32>
    %43 = arith.addf %42, %38 : vector<8x128xf32>
    %44 = arith.addf %43, %40 : vector<8x128xf32>
    %cst_22 = arith.constant 1.000000e+00 : f32
    %45 = vector.broadcast %cst_22 : f32 to vector<8x128xf32>
    %46 = arith.divf %45, %44 : vector<8x128xf32>
    %47 = arith.mulf %32, %46 : vector<8x128xf32>
    %48 = arith.mulf %34, %46 : vector<8x128xf32>
    %49 = arith.mulf %36, %46 : vector<8x128xf32>
    %50 = arith.mulf %38, %46 : vector<8x128xf32>
    %51 = arith.mulf %40, %46 : vector<8x128xf32>
    %52 = tpu.concatenate %47, %48, %49, %50, %51 in 0 : vector<8x128xf32>, vector<8x128xf32>, vector<8x128xf32>, vector<8x128xf32>, vector<8x128xf32> -> vector<40x128xf32>
    %c0_23 = arith.constant 0 : index
    %c0_24 = arith.constant 0 : index
    %53 = vector.load %arg11[%c0_23, %c0_24] : memref<160x40xf32, #tpu.memory_space<vmem>>, vector<160x40xf32>
    %cst_25 = arith.constant dense<0.000000e+00> : vector<160x128xf32>
    %54 = tpu.matmul %53, %52, %cst_25 {dimension_numbers = #tpu.dot_dimension_numbers<[1], [0], [0], [1], [0, 0, 1, 1], [], []>} : vector<160x40xf32>, vector<40x128xf32>, vector<160x128xf32> -> vector<160x128xf32>
    %55 = arith.mulf %54, %17 : vector<160x128xf32>
    %56 = vector.extract_strided_slice %55 {offsets = [0, 0], sizes = [32, 128], strides = [1, 1]} : vector<160x128xf32> to vector<32x128xf32>
    %57 = vector.extract_strided_slice %55 {offsets = [32, 0], sizes = [32, 128], strides = [1, 1]} : vector<160x128xf32> to vector<32x128xf32>
    %58 = arith.addf %56, %57 : vector<32x128xf32>
    %59 = vector.extract_strided_slice %55 {offsets = [64, 0], sizes = [32, 128], strides = [1, 1]} : vector<160x128xf32> to vector<32x128xf32>
    %60 = arith.addf %58, %59 : vector<32x128xf32>
    %61 = vector.extract_strided_slice %55 {offsets = [96, 0], sizes = [32, 128], strides = [1, 1]} : vector<160x128xf32> to vector<32x128xf32>
    %62 = arith.addf %60, %61 : vector<32x128xf32>
    %63 = vector.extract_strided_slice %55 {offsets = [128, 0], sizes = [32, 128], strides = [1, 1]} : vector<160x128xf32> to vector<32x128xf32>
    %64 = arith.addf %62, %63 : vector<32x128xf32>
    %c0_26 = arith.constant 0 : index
    %c0_27 = arith.constant 0 : index
    %65 = vector.load %arg12[%c0_26, %c0_27] : memref<32x32xf32, #tpu.memory_space<vmem>>, vector<32x32xf32>
    %cst_28 = arith.constant dense<0.000000e+00> : vector<32x128xf32>
    %66 = tpu.matmul %65, %64, %cst_28 {dimension_numbers = #tpu.dot_dimension_numbers<[1], [0], [0], [1], [0, 0, 1, 1], [], []>} : vector<32x32xf32>, vector<32x128xf32>, vector<32x128xf32> -> vector<32x128xf32>
    %c0_29 = arith.constant 0 : index
    %c0_30 = arith.constant 0 : index
    %67 = vector.load %arg13[%c0_29, %c0_30] : memref<32x1xf32, #tpu.memory_space<vmem>>, vector<32x1xf32>
    %68 = vector.broadcast %67 : vector<32x1xf32> to vector<32x128xf32>
    %69 = arith.addf %66, %68 : vector<32x128xf32>
    %cst_31 = arith.constant 0.000000e+00 : f32
    %70 = vector.broadcast %cst_31 : f32 to vector<32x128xf32>
    %71 = arith.cmpf oge, %69, %70 : vector<32x128xf32>
    %cst_32 = arith.constant 0.00999999977 : f32
    %72 = vector.broadcast %cst_32 : f32 to vector<32x128xf32>
    %73 = arith.mulf %72, %69 : vector<32x128xf32>
    %74 = arith.select %71, %69, %73 : vector<32x128xi1>, vector<32x128xf32>
    %c0_33 = arith.constant 0 : index
    %c0_34 = arith.constant 0 : index
    %75 = vector.load %arg14[%c0_33, %c0_34] : memref<8x32xf32, #tpu.memory_space<vmem>>, vector<8x32xf32>
    %cst_35 = arith.constant dense<0.000000e+00> : vector<8x128xf32>
    %76 = tpu.matmul %75, %74, %cst_35 {dimension_numbers = #tpu.dot_dimension_numbers<[1], [0], [0], [1], [0, 0, 1, 1], [], []>} : vector<8x32xf32>, vector<32x128xf32>, vector<8x128xf32> -> vector<8x128xf32>
    %c0_36 = arith.constant 0 : index
    %c0_37 = arith.constant 0 : index
    %77 = vector.load %arg15[%c0_36, %c0_37] : memref<8x1xf32, #tpu.memory_space<vmem>>, vector<8x1xf32>
    %78 = vector.broadcast %77 : vector<8x1xf32> to vector<8x128xf32>
    %79 = arith.addf %76, %78 : vector<8x128xf32>
    %c0_38 = arith.constant 0 : index
    %c0_39 = arith.constant 0 : index
    %80 = vector.load %arg16[%c0_38, %c0_39] : memref<8x128xf32, #tpu.memory_space<vmem>>, vector<8x128xf32>
    tpu.vector_store %arg16[%c0_38, %c0_39], %79 {strides = array<i32>} : memref<8x128xf32, #tpu.memory_space<vmem>>, vector<8x128xf32>,
    return
  }
  func.func @transform_0(%arg0: i32) -> (i32, i32) {
    %c0_i32 = arith.constant 0 : i32
    %c0_i32_0 = arith.constant 0 : i32
    return %c0_i32, %arg0 : i32, i32
  }
  func.func @transform_1(%arg0: i32) -> (i32, i32) {
    %c0_i32 = arith.constant 0 : i32
    %c0_i32_0 = arith.constant 0 : i32
    return %c0_i32, %arg0 : i32, i32
  }
  func.func @transform_2(%arg0: i32) -> (i32, i32) {
    %c0_i32 = arith.constant 0 : i32
    %c0_i32_0 = arith.constant 0 : i32
    return %c0_i32, %arg0 : i32, i32
  }
  func.func @transform_3(%arg0: i32) -> (i32, i32) {
    %c0_i32 = arith.constant 0 : i32
    %c0_i32_0 = arith.constant 0 : i32
    %c0_i32_1 = arith.constant 0 : i32
    return %c0_i32, %c0_i32_0 : i32, i32
  }
  func.func @transform_4(%arg0: i32) -> (i32, i32) {
    %c0_i32 = arith.constant 0 : i32
    %c0_i32_0 = arith.constant 0 : i32
    %c0_i32_1 = arith.constant 0 : i32
    return %c0_i32, %c0_i32_0 : i32, i32
  }
  func.func @transform_5(%arg0: i32) -> (i32, i32) {
    %c0_i32 = arith.constant 0 : i32
    %c0_i32_0 = arith.constant 0 : i32
    %c0_i32_1 = arith.constant 0 : i32
    return %c0_i32, %c0_i32_0 : i32, i32
  }
  func.func @transform_6(%arg0: i32) -> (i32, i32) {
    %c0_i32 = arith.constant 0 : i32
    %c0_i32_0 = arith.constant 0 : i32
    %c0_i32_1 = arith.constant 0 : i32
    return %c0_i32, %c0_i32_0 : i32, i32
  }
  func.func @transform_7(%arg0: i32) -> (i32, i32) {
    %c0_i32 = arith.constant 0 : i32
    %c0_i32_0 = arith.constant 0 : i32
    %c0_i32_1 = arith.constant 0 : i32
    return %c0_i32, %c0_i32_0 : i32, i32
  }
  func.func @transform_8(%arg0: i32) -> (i32, i32) {
    %c0_i32 = arith.constant 0 : i32
    %c0_i32_0 = arith.constant 0 : i32
    %c0_i32_1 = arith.constant 0 : i32
    return %c0_i32, %c0_i32_0 : i32, i32
  }
  func.func @transform_9(%arg0: i32) -> (i32, i32) {
    %c0_i32 = arith.constant 0 : i32
    %c0_i32_0 = arith.constant 0 : i32
    %c0_i32_1 = arith.constant 0 : i32
    return %c0_i32, %c0_i32_0 : i32, i32
  }
  func.func @transform_10(%arg0: i32) -> (i32, i32) {
    %c0_i32 = arith.constant 0 : i32
    %c0_i32_0 = arith.constant 0 : i32
    %c0_i32_1 = arith.constant 0 : i32
    return %c0_i32, %c0_i32_0 : i32, i32
  }
  func.func @transform_11(%arg0: i32) -> (i32, i32) {
    %c0_i32 = arith.constant 0 : i32
    %c0_i32_0 = arith.constant 0 : i32
    %c0_i32_1 = arith.constant 0 : i32
    return %c0_i32, %c0_i32_0 : i32, i32
  }
  func.func @transform_12(%arg0: i32) -> (i32, i32) {
    %c0_i32 = arith.constant 0 : i32
    %c0_i32_0 = arith.constant 0 : i32
    %c0_i32_1 = arith.constant 0 : i32
    return %c0_i32, %c0_i32_0 : i32, i32
  }
  func.func @transform_13(%arg0: i32) -> (i32, i32) {
    %c0_i32 = arith.constant 0 : i32
    %c0_i32_0 = arith.constant 0 : i32
    %c0_i32_1 = arith.constant 0 : i32
    return %c0_i32, %c0_i32_0 : i32, i32
  }
  func.func @transform_14(%arg0: i32) -> (i32, i32) {
    %c0_i32 = arith.constant 0 : i32
    %c0_i32_0 = arith.constant 0 : i32
    %c0_i32_1 = arith.constant 0 : i32
    return %c0_i32, %c0_i32_0 : i32, i32
  }
  func.func @transform_15(%arg0: i32) -> (i32, i32) {
    %c0_i32 = arith.constant 0 : i32
    %c0_i32_0 = arith.constant 0 : i32
    return %c0_i32, %arg0 : i32, i32
  }
}

</mosaic_0001>

<llo_original>
// kernel: tpu_custom_call.1
$region0: #{tpu_custom_call.1}
  #allocation0 [shape = 'u32[]', space=smem, size = 0x4, offset = 0x4, fixed_abs, tag = 'smem constant byte address 0x4 - core index']
  #allocation1 [shape = 'u32[144,128]{1,0:T(1,128)}', space=vmem, size = 0x12000, scoped, tag = 'internal scratch']
  %s0 = inlined_call_operand.hbm [shape: f32[16,256], index: 0, kind: input, shape index: {}]
  %s1 = inlined_call_operand.vmem [shape: f32[80,256], index: 1, kind: input, shape index: {}]
  %s2 = inlined_call_operand.vmem [shape: f32[80,256], index: 2, kind: input, shape index: {}]
  %s3 = inlined_call_operand.vmem [shape: f32[32,16], index: 3, kind: input, shape index: {}]
  %s4 = inlined_call_operand.vmem [shape: f32[32,1], index: 4, kind: input, shape index: {}]
  %s5 = inlined_call_operand.vmem [shape: f32[160,80], index: 5, kind: input, shape index: {}]
  %s6 = inlined_call_operand.vmem [shape: f32[160,1], index: 6, kind: input, shape index: {}]
  %s7 = inlined_call_operand.vmem [shape: f32[160,80], index: 7, kind: input, shape index: {}]
  %s8 = inlined_call_operand.vmem [shape: f32[160,1], index: 8, kind: input, shape index: {}]
  %s9 = inlined_call_operand.hbm [shape: f32[40,160], index: 9, kind: input, shape index: {}]
  %s10 = inlined_call_operand.vmem [shape: f32[160,40], index: 10, kind: input, shape index: {}]
  %s11 = inlined_call_operand.hbm [shape: f32[32,32], index: 11, kind: input, shape index: {}]
  %s12 = inlined_call_operand.vmem [shape: f32[32,1], index: 12, kind: input, shape index: {}]
  %s13 = inlined_call_operand.vmem [shape: f32[8,32], index: 13, kind: input, shape index: {}]
  %s14 = inlined_call_operand.vmem [shape: f32[8,1], index: 14, kind: input, shape index: {}]
  %s15 = inlined_call_operand.hbm [shape: f32[8,256], index: 15, kind: output, shape index: {}]
  %s16 = sld [smem:[#allocation0]]
  $region181: #{tpu_custom_call.1} parent=0
    _
  %s18 = ssub.s32 1, %s16
  %s19 = scalar_select 0, %s18, %s16
  $region1: #{tpu_custom_call.1} parent=0
    #allocation2 [shape = 'u8[16384]{0}', space=vmem, size = 0x4000, scoped, tag = 'input window, operand 0']
    #allocation3 [shape = 's32[2]{0}', space=sflag, size = 0x8, scoped, tag = 'scoped memory for tpu_custom_call.1']
    #allocation4 [shape = 's32[2]{0}', space=sflag, size = 0x8, scoped, tag = 'scoped memory for tpu_custom_call.1']
    #allocation5 [shape = 'u8[81920]{0}', space=vmem, size = 0x14000, scoped, tag = 'input window, operand 1']
    #allocation6 [shape = 'u8[81920]{0}', space=vmem, size = 0x14000, scoped, tag = 'input window, operand 2']
    #allocation7 [shape = 'u8[40960]{0}', space=vmem, size = 0xa000, scoped, tag = 'input window, operand 9, single buffered']
    #allocation8 [shape = 's32[1]{0}', space=sflag, size = 0x4, scoped, tag = 'scoped memory for tpu_custom_call.1']
    #allocation9 [shape = 'u8[16384]{0}', space=vmem, size = 0x4000, scoped, tag = 'input window, operand 11, single buffered']
    #allocation10 [shape = 'u8[8192]{0}', space=vmem, size = 0x2000, scoped, tag = 'output window, operand 0']
    %20 = vsyncpa [#allocation3], 0
    %s21 = scalar_lea.sflag [#allocation3], 1
    %22 = vsyncpa %s21, 0
    %23 = vsyncpa [#allocation8], 0
    %24 = vsyncpa [#allocation4], 0
    %s25 = scalar_lea.sflag [#allocation4], 1
    %26 = vsyncpa %s25, 0
    loop: start=0, step=1, limit=4
    $region2: #{tpu_custom_call.1} parent=1 // loop_pre_header
      _
    $region3: #{tpu_custom_call.1} parent=1 // loop_header
      %s28 = sphi 0, %s32
      %p29 = scmp.ge.s32.totalorder %s28, 4
      %s38 = sphi 0, %s40
      %s41 = sphi 0, %s38
      %s42 = sphi 0, %s41
      %s58 = sphi 0, %s42
      %s64 = sphi 0, %s66
      %s67 = sphi 0, %s64
      %s68 = sphi 0, %s67
      %s84 = sphi 0, %s68
      %s90 = sphi 0, %s92
      %s93 = sphi 0, %s90
      %s94 = sphi 0, %s93
      %s110 = sphi 0, %s94
      %s114 = sphi 0, %s114
      %s116 = sphi 0, %s114
      %s117 = sphi 0, %s116
      %s131 = sphi 0, %s117
      %s135 = sphi 0, %s135
      %s137 = sphi 0, %s135
      %s138 = sphi 0, %s137
      %s152 = sphi 0, %s138
      %s156 = sphi 0, %s156
      %s158 = sphi 0, %s156
      %s159 = sphi 0, %s158
      %s173 = sphi 0, %s159
      %s177 = sphi 0, %s177
      %s179 = sphi 0, %s177
      %s180 = sphi 0, %s179
      %s194 = sphi 0, %s180
      %s198 = sphi 0, %s198
      %s200 = sphi 0, %s198
      %s201 = sphi 0, %s200
      %s215 = sphi 0, %s201
      %s219 = sphi 0, %s219
      %s221 = sphi 0, %s219
      %s222 = sphi 0, %s221
      %s236 = sphi 0, %s222
      %s240 = sphi 0, %s240
      %s242 = sphi 0, %s240
      %s243 = sphi 0, %s242
      %s257 = sphi 0, %s243
      %s261 = sphi 0, %s261
      %s263 = sphi 0, %s261
      %s264 = sphi 0, %s263
      %s278 = sphi 0, %s264
      %s282 = sphi 0, %s282
      %s284 = sphi 0, %s282
      %s285 = sphi 0, %s284
      %s299 = sphi 0, %s285
      %s303 = sphi 0, %s303
      %s305 = sphi 0, %s303
      %s306 = sphi 0, %s305
      %s320 = sphi 0, %s306
      %s324 = sphi 0, %s324
      %s326 = sphi 0, %s324
      %s327 = sphi 0, %s326
      %s341 = sphi 0, %s327
      %s345 = sphi 0, %s345
      %s347 = sphi 0, %s345
      %s348 = sphi 0, %s347
      %s362 = sphi 0, %s348
      %s368 = sphi 0, %s370
      %s371 = sphi 0, %s368
      %s372 = sphi 0, %s371
      %s388 = sphi 0, %s372
    $region4: #{tpu_custom_call.1} parent=1 // loop_header_branch
      %31 = sbr.rel (%p29) target = $region8
    $region5: #{tpu_custom_call.1} parent=1 // loop_body
      %s33 = ssub.s32 %s28, 1
      %s34 = ssub.s32 %s28, 2
      %s35 = sadd.s32 %s28, 1
      %s36 = ssub.s32 %s28, %s35
      %p37 = scmp.eq.s32.totalorder %s36, 0
      %s39 = sadd.s32 %s38, 1
      %s40 = scalar_select %p37, %s38, %s39
      %p43 = pneg %p37
      %p44 = scmp.eq.s32.totalorder %s28, 1
      %p45 = por %p43, %p44
      %p46 = scmp.ne.s32.totalorder %s38, %s41
      %p47 = scmp.eq.s32.totalorder %s28, 0
      %p48 = por %p46, %p47
      %p49 = scmp.ne.s32.totalorder %s38, %s41
      %p50 = scmp.eq.s32.totalorder %s33, 1
      %p51 = por %p49, %p50
      %p52 = scmp.ne.s32.totalorder %s41, %s42
      %p53 = scmp.eq.s32.totalorder %s33, 0
      %p54 = por %p52, %p53
      %p55 = scmp.ne.s32.totalorder %s41, %s42
      %p56 = scmp.eq.s32.totalorder %s34, 1
      %p57 = por %p55, %p56
      %p59 = scmp.ne.s32.totalorder %s42, %s58
      %p60 = scmp.eq.s32.totalorder %s34, 0
      %p61 = por %p59, %p60
      %s62 = ssub.s32 %s28, %s35
      %p63 = scmp.eq.s32.totalorder %s62, 0
      %s65 = sadd.s32 %s64, 1
      %s66 = scalar_select %p63, %s64, %s65
      %p69 = pneg %p63
      %p70 = scmp.eq.s32.totalorder %s28, 1
      %p71 = por %p69, %p70
      %p72 = scmp.ne.s32.totalorder %s64, %s67
      %p73 = scmp.eq.s32.totalorder %s28, 0
      %p74 = por %p72, %p73
      %p75 = scmp.ne.s32.totalorder %s64, %s67
      %p76 = scmp.eq.s32.totalorder %s33, 1
      %p77 = por %p75, %p76
      %p78 = scmp.ne.s32.totalorder %s67, %s68
      %p79 = scmp.eq.s32.totalorder %s33, 0
      %p80 = por %p78, %p79
      %p81 = scmp.ne.s32.totalorder %s67, %s68
      %p82 = scmp.eq.s32.totalorder %s34, 1
      %p83 = por %p81, %p82
      %p85 = scmp.ne.s32.totalorder %s68, %s84
      %p86 = scmp.eq.s32.totalorder %s34, 0
      %p87 = por %p85, %p86
      %s88 = ssub.s32 %s28, %s35
      %p89 = scmp.eq.s32.totalorder %s88, 0
      %s91 = sadd.s32 %s90, 1
      %s92 = scalar_select %p89, %s90, %s91
      %p95 = pneg %p89
      %p96 = scmp.eq.s32.totalorder %s28, 1
      %p97 = por %p95, %p96
      %p98 = scmp.ne.s32.totalorder %s90, %s93
      %p99 = scmp.eq.s32.totalorder %s28, 0
      %p100 = por %p98, %p99
      %p101 = scmp.ne.s32.totalorder %s90, %s93
      %p102 = scmp.eq.s32.totalorder %s33, 1
      %p103 = por %p101, %p102
      %p104 = scmp.ne.s32.totalorder %s93, %s94
      %p105 = scmp.eq.s32.totalorder %s33, 0
      %p106 = por %p104, %p105
      %p107 = scmp.ne.s32.totalorder %s93, %s94
      %p108 = scmp.eq.s32.totalorder %s34, 1
      %p109 = por %p107, %p108
      %p111 = scmp.ne.s32.totalorder %s94, %s110
      %p112 = scmp.eq.s32.totalorder %s34, 0
      %p113 = por %p111, %p112
      %s115 = sadd.s32 %s114, 1
      %p118 = scmp.eq.s32.totalorder %s28, 1
      %p119 = scmp.ne.s32.totalorder %s114, %s116
      %p120 = scmp.eq.s32.totalorder %s28, 0
      %p121 = por %p119, %p120
      %p122 = scmp.ne.s32.totalorder %s114, %s116
      %p123 = scmp.eq.s32.totalorder %s33, 1
      %p124 = por %p122, %p123
      %p125 = scmp.ne.s32.totalorder %s116, %s117
      %p126 = scmp.eq.s32.totalorder %s33, 0
      %p127 = por %p125, %p126
      %p128 = scmp.ne.s32.totalorder %s116, %s117
      %p129 = scmp.eq.s32.totalorder %s34, 1
      %p130 = por %p128, %p129
      %p132 = scmp.ne.s32.totalorder %s117, %s131
      %p133 = scmp.eq.s32.totalorder %s34, 0
      %p134 = por %p132, %p133
      %s136 = sadd.s32 %s135, 1
      %p139 = scmp.eq.s32.totalorder %s28, 1
      %p140 = scmp.ne.s32.totalorder %s135, %s137
      %p141 = scmp.eq.s32.totalorder %s28, 0
      %p142 = por %p140, %p141
      %p143 = scmp.ne.s32.totalorder %s135, %s137
      %p144 = scmp.eq.s32.totalorder %s33, 1
      %p145 = por %p143, %p144
      %p146 = scmp.ne.s32.totalorder %s137, %s138
      %p147 = scmp.eq.s32.totalorder %s33, 0
      %p148 = por %p146, %p147
      %p149 = scmp.ne.s32.totalorder %s137, %s138
      %p150 = scmp.eq.s32.totalorder %s34, 1
      %p151 = por %p149, %p150
      %p153 = scmp.ne.s32.totalorder %s138, %s152
      %p154 = scmp.eq.s32.totalorder %s34, 0
      %p155 = por %p153, %p154
      %s157 = sadd.s32 %s156, 1
      %p160 = scmp.eq.s32.totalorder %s28, 1
      %p161 = scmp.ne.s32.totalorder %s156, %s158
      %p162 = scmp.eq.s32.totalorder %s28, 0
      %p163 = por %p161, %p162
      %p164 = scmp.ne.s32.totalorder %s156, %s158
      %p165 = scmp.eq.s32.totalorder %s33, 1
      %p166 = por %p164, %p165
      %p167 = scmp.ne.s32.totalorder %s158, %s159
      %p168 = scmp.eq.s32.totalorder %s33, 0
      %p169 = por %p167, %p168
      %p170 = scmp.ne.s32.totalorder %s158, %s159
      %p171 = scmp.eq.s32.totalorder %s34, 1
      %p172 = por %p170, %p171
      %p174 = scmp.ne.s32.totalorder %s159, %s173
      %p175 = scmp.eq.s32.totalorder %s34, 0
      %p176 = por %p174, %p175
      %s178 = sadd.s32 %s177, 1
      %p181 = scmp.eq.s32.totalorder %s28, 1
      %p182 = scmp.ne.s32.totalorder %s177, %s179
      %p183 = scmp.eq.s32.totalorder %s28, 0
      %p184 = por %p182, %p183
      %p185 = scmp.ne.s32.totalorder %s177, %s179
      %p186 = scmp.eq.s32.totalorder %s33, 1
      %p187 = por %p185, %p186
      %p188 = scmp.ne.s32.totalorder %s179, %s180
      %p189 = scmp.eq.s32.totalorder %s33, 0
      %p190 = por %p188, %p189
      %p191 = scmp.ne.s32.totalorder %s179, %s180
      %p192 = scmp.eq.s32.totalorder %s34, 1
      %p193 = por %p191, %p192
      %p195 = scmp.ne.s32.totalorder %s180, %s194
      %p196 = scmp.eq.s32.totalorder %s34, 0
      %p197 = por %p195, %p196
      %s199 = sadd.s32 %s198, 1
      %p202 = scmp.eq.s32.totalorder %s28, 1
      %p203 = scmp.ne.s32.totalorder %s198, %s200
      %p204 = scmp.eq.s32.totalorder %s28, 0
      %p205 = por %p203, %p204
      %p206 = scmp.ne.s32.totalorder %s198, %s200
      %p207 = scmp.eq.s32.totalorder %s33, 1
      %p208 = por %p206, %p207
      %p209 = scmp.ne.s32.totalorder %s200, %s201
      %p210 = scmp.eq.s32.totalorder %s33, 0
      %p211 = por %p209, %p210
      %p212 = scmp.ne.s32.totalorder %s200, %s201
      %p213 = scmp.eq.s32.totalorder %s34, 1
      %p214 = por %p212, %p213
      %p216 = scmp.ne.s32.totalorder %s201, %s215
      %p217 = scmp.eq.s32.totalorder %s34, 0
      %p218 = por %p216, %p217
      %s220 = sadd.s32 %s219, 1
      %p223 = scmp.eq.s32.totalorder %s28, 1
      %p224 = scmp.ne.s32.totalorder %s219, %s221
      %p225 = scmp.eq.s32.totalorder %s28, 0
      %p226 = por %p224, %p225
      %p227 = scmp.ne.s32.totalorder %s219, %s221
      %p228 = scmp.eq.s32.totalorder %s33, 1
      %p229 = por %p227, %p228
      %p230 = scmp.ne.s32.totalorder %s221, %s222
      %p231 = scmp.eq.s32.totalorder %s33, 0
      %p232 = por %p230, %p231
      %p233 = scmp.ne.s32.totalorder %s221, %s222
      %p234 = scmp.eq.s32.totalorder %s34, 1
      %p235 = por %p233, %p234
      %p237 = scmp.ne.s32.totalorder %s222, %s236
      %p238 = scmp.eq.s32.totalorder %s34, 0
      %p239 = por %p237, %p238
      %s241 = sadd.s32 %s240, 1
      %p244 = scmp.eq.s32.totalorder %s28, 1
      %p245 = scmp.ne.s32.totalorder %s240, %s242
      %p246 = scmp.eq.s32.totalorder %s28, 0
      %p247 = por %p245, %p246
      %p248 = scmp.ne.s32.totalorder %s240, %s242
      %p249 = scmp.eq.s32.totalorder %s33, 1
      %p250 = por %p248, %p249
      %p251 = scmp.ne.s32.totalorder %s242, %s243
      %p252 = scmp.eq.s32.totalorder %s33, 0
      %p253 = por %p251, %p252
      %p254 = scmp.ne.s32.totalorder %s242, %s243
      %p255 = scmp.eq.s32.totalorder %s34, 1
      %p256 = por %p254, %p255
      %p258 = scmp.ne.s32.totalorder %s243, %s257
      %p259 = scmp.eq.s32.totalorder %s34, 0
      %p260 = por %p258, %p259
      %s262 = sadd.s32 %s261, 1
      %p265 = scmp.eq.s32.totalorder %s28, 1
      %p266 = scmp.ne.s32.totalorder %s261, %s263
      %p267 = scmp.eq.s32.totalorder %s28, 0
      %p268 = por %p266, %p267
      %p269 = scmp.ne.s32.totalorder %s261, %s263
      %p270 = scmp.eq.s32.totalorder %s33, 1
      %p271 = por %p269, %p270
      %p272 = scmp.ne.s32.totalorder %s263, %s264
      %p273 = scmp.eq.s32.totalorder %s33, 0
      %p274 = por %p272, %p273
      %p275 = scmp.ne.s32.totalorder %s263, %s264
      %p276 = scmp.eq.s32.totalorder %s34, 1
      %p277 = por %p275, %p276
      %p279 = scmp.ne.s32.totalorder %s264, %s278
      %p280 = scmp.eq.s32.totalorder %s34, 0
      %p281 = por %p279, %p280
      %s283 = sadd.s32 %s282, 1
      %p286 = scmp.eq.s32.totalorder %s28, 1
      %p287 = scmp.ne.s32.totalorder %s282, %s284
      %p288 = scmp.eq.s32.totalorder %s28, 0
      %p289 = por %p287, %p288
      %p290 = scmp.ne.s32.totalorder %s282, %s284
      %p291 = scmp.eq.s32.totalorder %s33, 1
      %p292 = por %p290, %p291
      %p293 = scmp.ne.s32.totalorder %s284, %s285
      %p294 = scmp.eq.s32.totalorder %s33, 0
      %p295 = por %p293, %p294
      %p296 = scmp.ne.s32.totalorder %s284, %s285
      %p297 = scmp.eq.s32.totalorder %s34, 1
      %p298 = por %p296, %p297
      %p300 = scmp.ne.s32.totalorder %s285, %s299
      %p301 = scmp.eq.s32.totalorder %s34, 0
      %p302 = por %p300, %p301
      %s304 = sadd.s32 %s303, 1
      %p307 = scmp.eq.s32.totalorder %s28, 1
      %p308 = scmp.ne.s32.totalorder %s303, %s305
      %p309 = scmp.eq.s32.totalorder %s28, 0
      %p310 = por %p308, %p309
      %p311 = scmp.ne.s32.totalorder %s303, %s305
      %p312 = scmp.eq.s32.totalorder %s33, 1
      %p313 = por %p311, %p312
      %p314 = scmp.ne.s32.totalorder %s305, %s306
      %p315 = scmp.eq.s32.totalorder %s33, 0
      %p316 = por %p314, %p315
      %p317 = scmp.ne.s32.totalorder %s305, %s306
      %p318 = scmp.eq.s32.totalorder %s34, 1
      %p319 = por %p317, %p318
      %p321 = scmp.ne.s32.totalorder %s306, %s320
      %p322 = scmp.eq.s32.totalorder %s34, 0
      %p323 = por %p321, %p322
      %s325 = sadd.s32 %s324, 1
      %p328 = scmp.eq.s32.totalorder %s28, 1
      %p329 = scmp.ne.s32.totalorder %s324, %s326
      %p330 = scmp.eq.s32.totalorder %s28, 0
      %p331 = por %p329, %p330
      %p332 = scmp.ne.s32.totalorder %s324, %s326
      %p333 = scmp.eq.s32.totalorder %s33, 1
      %p334 = por %p332, %p333
      %p335 = scmp.ne.s32.totalorder %s326, %s327
      %p336 = scmp.eq.s32.totalorder %s33, 0
      %p337 = por %p335, %p336
      %p338 = scmp.ne.s32.totalorder %s326, %s327
      %p339 = scmp.eq.s32.totalorder %s34, 1
      %p340 = por %p338, %p339
      %p342 = scmp.ne.s32.totalorder %s327, %s341
      %p343 = scmp.eq.s32.totalorder %s34, 0
      %p344 = por %p342, %p343
      %s346 = sadd.s32 %s345, 1
      %p349 = scmp.eq.s32.totalorder %s28, 1
      %p350 = scmp.ne.s32.totalorder %s345, %s347
      %p351 = scmp.eq.s32.totalorder %s28, 0
      %p352 = por %p350, %p351
      %p353 = scmp.ne.s32.totalorder %s345, %s347
      %p354 = scmp.eq.s32.totalorder %s33, 1
      %p355 = por %p353, %p354
      %p356 = scmp.ne.s32.totalorder %s347, %s348
      %p357 = scmp.eq.s32.totalorder %s33, 0
      %p358 = por %p356, %p357
      %p359 = scmp.ne.s32.totalorder %s347, %s348
      %p360 = scmp.eq.s32.totalorder %s34, 1
      %p361 = por %p359, %p360
      %p363 = scmp.ne.s32.totalorder %s348, %s362
      %p364 = scmp.eq.s32.totalorder %s34, 0
      %p365 = por %p363, %p364
      %s366 = ssub.s32 %s28, %s35
      %p367 = scmp.eq.s32.totalorder %s366, 0
      %s369 = sadd.s32 %s368, 1
      %s370 = scalar_select %p367, %s368, %s369
      %p373 = pneg %p367
      %p374 = scmp.eq.s32.totalorder %s28, 1
      %p375 = por %p373, %p374
      %p376 = scmp.ne.s32.totalorder %s368, %s371
      %p377 = scmp.eq.s32.totalorder %s28, 0
      %p378 = por %p376, %p377
      %p379 = scmp.ne.s32.totalorder %s368, %s371
      %p380 = scmp.eq.s32.totalorder %s33, 1
      %p381 = por %p379, %p380
      %p382 = scmp.ne.s32.totalorder %s371, %s372
      %p383 = scmp.eq.s32.totalorder %s33, 0
      %p384 = por %p382, %p383
      %p385 = scmp.ne.s32.totalorder %s371, %s372
      %p386 = scmp.eq.s32.totalorder %s34, 1
      %p387 = por %p385, %p386
      %p389 = scmp.ne.s32.totalorder %s372, %s388
      %p390 = scmp.eq.s32.totalorder %s34, 0
      %p391 = por %p389, %p390
      %p392 = scmp.le.s32.totalorder 1, %s28
      %p393 = scmp.lt.s32.totalorder %s28, 3
      %p394 = pnand %p392, %p393
      %p395 = pneg %p394
      // Predicated region
      $region9: #{tpu_custom_call.1} parent=5 // pred_check
        _
      $region10: #{tpu_custom_call.1} parent=5 // pred_check_branch
        %397 = sbr.rel (%p394) target = $region12
      $region11: #{tpu_custom_call.1} parent=5 // pred_region
        %s398 = ssub.s32 %s28, 1
        // Predicated region
        $region13: #{tpu_custom_call.1} parent=11 // pred_check
          %p399 = pneg %p127
        $region14: #{tpu_custom_call.1} parent=11 // pred_check_branch
          %401 = sbr.rel (%p399) target = $region16
        $region15: #{tpu_custom_call.1} parent=11 // pred_region
          _
        $region16: #{tpu_custom_call.1} parent=11 // pred_fallthru
          _
        // Predicated region
        $region17: #{tpu_custom_call.1} parent=11 // pred_check
          %p402 = pneg %p148
        $region18: #{tpu_custom_call.1} parent=11 // pred_check_branch
          %404 = sbr.rel (%p402) target = $region20
        $region19: #{tpu_custom_call.1} parent=11 // pred_region
          _
        $region20: #{tpu_custom_call.1} parent=11 // pred_fallthru
          _
        // Predicated region
        $region21: #{tpu_custom_call.1} parent=11 // pred_check
          %p405 = pneg %p169
        $region22: #{tpu_custom_call.1} parent=11 // pred_check_branch
          %407 = sbr.rel (%p405) target = $region24
        $region23: #{tpu_custom_call.1} parent=11 // pred_region
          _
        $region24: #{tpu_custom_call.1} parent=11 // pred_fallthru
          _
        // Predicated region
        $region25: #{tpu_custom_call.1} parent=11 // pred_check
          %p408 = pneg %p190
        $region26: #{tpu_custom_call.1} parent=11 // pred_check_branch
          %410 = sbr.rel (%p408) target = $region28
        $region27: #{tpu_custom_call.1} parent=11 // pred_region
          _
        $region28: #{tpu_custom_call.1} parent=11 // pred_fallthru
          _
        // Predicated region
        $region29: #{tpu_custom_call.1} parent=11 // pred_check
          %p411 = pneg %p211
        $region30: #{tpu_custom_call.1} parent=11 // pred_check_branch
          %413 = sbr.rel (%p411) target = $region32
        $region31: #{tpu_custom_call.1} parent=11 // pred_region
          _
        $region32: #{tpu_custom_call.1} parent=11 // pred_fallthru
          _
        // Predicated region
        $region33: #{tpu_custom_call.1} parent=11 // pred_check
          %p414 = pneg %p232
        $region34: #{tpu_custom_call.1} parent=11 // pred_check_branch
          %416 = sbr.rel (%p414) target = $region36
        $region35: #{tpu_custom_call.1} parent=11 // pred_region
          _
        $region36: #{tpu_custom_call.1} parent=11 // pred_fallthru
          _
        // Predicated region
        $region37: #{tpu_custom_call.1} parent=11 // pred_check
          %p417 = pneg %p253
        $region38: #{tpu_custom_call.1} parent=11 // pred_check_branch
          %419 = sbr.rel (%p417) target = $region40
        $region39: #{tpu_custom_call.1} parent=11 // pred_region
          %s421 = ssub.s32 1280, 1280
          %422 = vsyncadd [#allocation8], %s421
          %s423 = sshll.u32 [#allocation7], 4
          %s424 = int_to_ptr.vmem [resolvable:$true] %s423
          %429 = dma.hbm_to_vmem [thread:$0]  %s9, 1280, %s424, [#allocation8], 256, 256, 16
        $region40: #{tpu_custom_call.1} parent=11 // pred_fallthru
          _
        // Predicated region
        $region41: #{tpu_custom_call.1} parent=11 // pred_check
          %p430 = pneg %p274
        $region42: #{tpu_custom_call.1} parent=11 // pred_check_branch
          %432 = sbr.rel (%p430) target = $region44
        $region43: #{tpu_custom_call.1} parent=11 // pred_region
          _
        $region44: #{tpu_custom_call.1} parent=11 // pred_fallthru
          _
        // Predicated region
        $region45: #{tpu_custom_call.1} parent=11 // pred_check
          %p433 = pneg %p295
        $region46: #{tpu_custom_call.1} parent=11 // pred_check_branch
          %435 = sbr.rel (%p433) target = $region48
        $region47: #{tpu_custom_call.1} parent=11 // pred_region
          %s437 = ssub.s32 512, 512
          %438 = vsyncadd [#allocation8], %s437
          %s439 = sshll.u32 [#allocation9], 4
          %s440 = int_to_ptr.vmem [resolvable:$true] %s439
          %445 = dma.hbm_to_vmem [thread:$0]  %s11, 512, %s440, [#allocation8], 128, 128, 8
        $region48: #{tpu_custom_call.1} parent=11 // pred_fallthru
          _
        // Predicated region
        $region49: #{tpu_custom_call.1} parent=11 // pred_check
          %p446 = pneg %p316
        $region50: #{tpu_custom_call.1} parent=11 // pred_check_branch
          %448 = sbr.rel (%p446) target = $region52
        $region51: #{tpu_custom_call.1} parent=11 // pred_region
          _
        $region52: #{tpu_custom_call.1} parent=11 // pred_fallthru
          _
        // Predicated region
        $region53: #{tpu_custom_call.1} parent=11 // pred_check
          %p449 = pneg %p337
        $region54: #{tpu_custom_call.1} parent=11 // pred_check_branch
          %451 = sbr.rel (%p449) target = $region56
        $region55: #{tpu_custom_call.1} parent=11 // pred_region
          _
        $region56: #{tpu_custom_call.1} parent=11 // pred_fallthru
          _
        // Predicated region
        $region57: #{tpu_custom_call.1} parent=11 // pred_check
          %p452 = pneg %p358
        $region58: #{tpu_custom_call.1} parent=11 // pred_check_branch
          %454 = sbr.rel (%p452) target = $region60
        $region59: #{tpu_custom_call.1} parent=11 // pred_region
          _
        $region60: #{tpu_custom_call.1} parent=11 // pred_fallthru
          _
      $region12: #{tpu_custom_call.1} parent=5 // pred_fallthru
        _
      %p455 = scmp.lt.s32.totalorder %s28, 2
      // Predicated region
      $region61: #{tpu_custom_call.1} parent=5 // pred_check
        %p456 = pneg %p455
      $region62: #{tpu_custom_call.1} parent=5 // pred_check_branch
        %458 = sbr.rel (%p456) target = $region64
      $region63: #{tpu_custom_call.1} parent=5 // pred_region
        // Predicated region
        $region65: #{tpu_custom_call.1} parent=63 // pred_check
          %p459 = pneg %p48
        $region66: #{tpu_custom_call.1} parent=63 // pred_check_branch
          %461 = sbr.rel (%p459) target = $region68
        $region67: #{tpu_custom_call.1} parent=63 // pred_region
          %s462 = sand.u32 %s38, 1
          %s463 = scalar_lea.sflag [#allocation3], %s462
          %s464 = sand.u32 %s38, 1
          %s465 = smul.addr %s464, 16
          %s466 = scalar_lea.vmem [#allocation2], %s465
          %s468 = ssub.s32 256, 256
          %469 = vsyncadd %s463, %s468
          %s470 = smul.addr %s28, 128
          %s471 = scalar_lea.hbm %s0, %s470
          %s472 = sshll.u32 %s466, 4
          %s473 = int_to_ptr.vmem [resolvable:$true] %s472
          %478 = dma.hbm_to_vmem [thread:$0]  %s471, 256, %s473, %s463, 256, 128, 8
        $region68: #{tpu_custom_call.1} parent=63 // pred_fallthru
          _
        // Predicated region
        $region69: #{tpu_custom_call.1} parent=63 // pred_check
          %p479 = pneg %p74
        $region70: #{tpu_custom_call.1} parent=63 // pred_check_branch
          %481 = sbr.rel (%p479) target = $region72
        $region71: #{tpu_custom_call.1} parent=63 // pred_region
          %s482 = sand.u32 %s64, 1
          %s483 = sand.u32 %s64, 1
          %s484 = smul.addr %s483, 80
          %s485 = scalar_lea.vmem [#allocation5], %s484
          %s486 = smul.addr %s28, 8
          %s487 = scalar_lea.vmem %s1, %s486
          // Predicated region
          $region73: #{tpu_custom_call.1} parent=71 // pred_check
            _
          $region74: #{tpu_custom_call.1} parent=71 // pred_check_branch
            %489 = sbr.rel (0) target = $region76
          $region75: #{tpu_custom_call.1} parent=71 // pred_region
            // Predicated region
            $region77: #{tpu_custom_call.1} parent=75 // pred_check
              _
            $region78: #{tpu_custom_call.1} parent=75 // pred_check_branch
              %491 = sbr.rel (0) target = $region80
            $region79: #{tpu_custom_call.1} parent=75 // pred_region
              // Predicated region
              $region92: #{tpu_custom_call.1} parent=79 // pred_check
                _
              $region93: #{tpu_custom_call.1} parent=79 // pred_check_branch
                %524 = sbr.rel (0) target = $region95
              $region94: #{tpu_custom_call.1} parent=79 // pred_region
                loop: start=0, step=1, limit=1
                $region96: #{tpu_custom_call.1} parent=94 // loop_pre_header
                  _
                $region97: #{tpu_custom_call.1} parent=94 // loop_header
                  %s526 = sphi 0, %s530
                  %p527 = scmp.ge.s32.totalorder %s526, 1
                  %s531 = sphi %s487, %s487
                  %s532 = sphi %s485, %s485
                $region98: #{tpu_custom_call.1} parent=94 // loop_header_branch
                  %529 = sbr.rel (%p527) target = $region102
                $region99: #{tpu_custom_call.1} parent=94 // loop_body
                  %v533 = vld [vmem:[%s531] sm:$0xff]
                  %534 = vst [vmem:[%s532] sm:$0xff] %v533
                  %v535 = vld [vmem:[%s531 + $0x10] sm:$0xff]
                  %536 = vst [vmem:[%s532 + $0x8] sm:$0xff] %v535
                  %v537 = vld [vmem:[%s531 + $0x20] sm:$0xff]
                  %538 = vst [vmem:[%s532 + $0x10] sm:$0xff] %v537
                  %v539 = vld [vmem:[%s531 + $0x30] sm:$0xff]
                  %540 = vst [vmem:[%s532 + $0x18] sm:$0xff] %v539
                  %v541 = vld [vmem:[%s531 + $0x40] sm:$0xff]
                  %542 = vst [vmem:[%s532 + $0x20] sm:$0xff] %v541
                  %v543 = vld [vmem:[%s531 + $0x50] sm:$0xff]
                  %544 = vst [vmem:[%s532 + $0x28] sm:$0xff] %v543
                  %v545 = vld [vmem:[%s531 + $0x60] sm:$0xff]
                  %546 = vst [vmem:[%s532 + $0x30] sm:$0xff] %v545
                  %v547 = vld [vmem:[%s531 + $0x70] sm:$0xff]
                  %548 = vst [vmem:[%s532 + $0x38] sm:$0xff] %v547
                  %v549 = vld [vmem:[%s531 + $0x80] sm:$0xff]
                  %550 = vst [vmem:[%s532 + $0x40] sm:$0xff] %v549
                  %v551 = vld [vmem:[%s531 + $0x90] sm:$0xff]
                  %552 = vst [vmem:[%s532 + $0x48] sm:$0xff] %v551
                $region100: #{tpu_custom_call.1} parent=94 // loop_footer
                  %s530 = sadd.s32 1, %s526
                $region101: #{tpu_custom_call.1} parent=94 // loop_footer_branch
                  %525 = sbr.rel target = $region97
                $region102: #{tpu_custom_call.1} parent=94 // loop_exit
                  _
              $region95: #{tpu_custom_call.1} parent=79 // pred_fallthru
                _
              // Predicated region
              $region103: #{tpu_custom_call.1} parent=79 // pred_check
                _
              $region104: #{tpu_custom_call.1} parent=79 // pred_check_branch
                %554 = sbr.rel target = $region106
              $region105: #{tpu_custom_call.1} parent=79 // pred_region
                _
              $region106: #{tpu_custom_call.1} parent=79 // pred_fallthru
                _
            $region80: #{tpu_custom_call.1} parent=75 // pred_fallthru
              _
            // Predicated region
            $region81: #{tpu_custom_call.1} parent=75 // pred_check
              _
            $region82: #{tpu_custom_call.1} parent=75 // pred_check_branch
              %493 = sbr.rel target = $region84
            $region83: #{tpu_custom_call.1} parent=75 // pred_region
              loop: start=0, step=1, limit=1
              $region85: #{tpu_custom_call.1} parent=83 // loop_pre_header
                _
              $region86: #{tpu_custom_call.1} parent=83 // loop_header
                %s496 = sphi 0, %s500
                %p497 = scmp.ge.s32.totalorder %s496, 1
                %s501 = sphi %s487, %s487
                %s502 = sphi %s485, %s485
              $region87: #{tpu_custom_call.1} parent=83 // loop_header_branch
                %499 = sbr.rel (%p497) target = $region91
              $region88: #{tpu_custom_call.1} parent=83 // loop_body
                %v503 = vld [vmem:[%s501] sm:$0xff]
                %504 = vst [vmem:[%s502] sm:$0xff] %v503
                %v505 = vld [vmem:[%s501 + $0x10] sm:$0xff]
                %506 = vst [vmem:[%s502 + $0x8] sm:$0xff] %v505
                %v507 = vld [vmem:[%s501 + $0x20] sm:$0xff]
                %508 = vst [vmem:[%s502 + $0x10] sm:$0xff] %v507
                %v509 = vld [vmem:[%s501 + $0x30] sm:$0xff]
                %510 = vst [vmem:[%s502 + $0x18] sm:$0xff] %v509
                %v511 = vld [vmem:[%s501 + $0x40] sm:$0xff]
                %512 = vst [vmem:[%s502 + $0x20] sm:$0xff] %v511
                %v513 = vld [vmem:[%s501 + $0x50] sm:$0xff]
                %514 = vst [vmem:[%s502 + $0x28] sm:$0xff] %v513
                %v515 = vld [vmem:[%s501 + $0x60] sm:$0xff]
                %516 = vst [vmem:[%s502 + $0x30] sm:$0xff] %v515
                %v517 = vld [vmem:[%s501 + $0x70] sm:$0xff]
                %518 = vst [vmem:[%s502 + $0x38] sm:$0xff] %v517
                %v519 = vld [vmem:[%s501 + $0x80] sm:$0xff]
                %520 = vst [vmem:[%s502 + $0x40] sm:$0xff] %v519
                %v521 = vld [vmem:[%s501 + $0x90] sm:$0xff]
                %522 = vst [vmem:[%s502 + $0x48] sm:$0xff] %v521
              $region89: #{tpu_custom_call.1} parent=83 // loop_footer
                %s500 = sadd.s32 1, %s496
              $region90: #{tpu_custom_call.1} parent=83 // loop_footer_branch
                %495 = sbr.rel target = $region86
              $region91: #{tpu_custom_call.1} parent=83 // loop_exit
                _
            $region84: #{tpu_custom_call.1} parent=75 // pred_fallthru
              _
          $region76: #{tpu_custom_call.1} parent=71 // pred_fallthru
            _
          %555 = vnop
        $region72: #{tpu_custom_call.1} parent=63 // pred_fallthru
          _
        // Predicated region
        $region107: #{tpu_custom_call.1} parent=63 // pred_check
          %p556 = pneg %p100
        $region108: #{tpu_custom_call.1} parent=63 // pred_check_branch
          %558 = sbr.rel (%p556) target = $region110
        $region109: #{tpu_custom_call.1} parent=63 // pred_region
          %s559 = sand.u32 %s90, 1
          %s560 = sand.u32 %s90, 1
          %s561 = smul.addr %s560, 80
          %s562 = scalar_lea.vmem [#allocation6], %s561
          %s563 = smul.addr %s28, 8
          %s564 = scalar_lea.vmem %s2, %s563
          // Predicated region
          $region111: #{tpu_custom_call.1} parent=109 // pred_check
            _
          $region112: #{tpu_custom_call.1} parent=109 // pred_check_branch
            %566 = sbr.rel (0) target = $region114
          $region113: #{tpu_custom_call.1} parent=109 // pred_region
            // Predicated region
            $region115: #{tpu_custom_call.1} parent=113 // pred_check
              _
            $region116: #{tpu_custom_call.1} parent=113 // pred_check_branch
              %568 = sbr.rel (0) target = $region118
            $region117: #{tpu_custom_call.1} parent=113 // pred_region
              // Predicated region
              $region130: #{tpu_custom_call.1} parent=117 // pred_check
                _
              $region131: #{tpu_custom_call.1} parent=117 // pred_check_branch
                %601 = sbr.rel (0) target = $region133
              $region132: #{tpu_custom_call.1} parent=117 // pred_region
                loop: start=0, step=1, limit=1
                $region134: #{tpu_custom_call.1} parent=132 // loop_pre_header
                  _
                $region135: #{tpu_custom_call.1} parent=132 // loop_header
                  %s603 = sphi 0, %s607
                  %p604 = scmp.ge.s32.totalorder %s603, 1
                  %s608 = sphi %s564, %s564
                  %s609 = sphi %s562, %s562
                $region136: #{tpu_custom_call.1} parent=132 // loop_header_branch
                  %606 = sbr.rel (%p604) target = $region140
                $region137: #{tpu_custom_call.1} parent=132 // loop_body
                  %v610 = vld [vmem:[%s608] sm:$0xff]
                  %611 = vst [vmem:[%s609] sm:$0xff] %v610
                  %v612 = vld [vmem:[%s608 + $0x10] sm:$0xff]
                  %613 = vst [vmem:[%s609 + $0x8] sm:$0xff] %v612
                  %v614 = vld [vmem:[%s608 + $0x20] sm:$0xff]
                  %615 = vst [vmem:[%s609 + $0x10] sm:$0xff] %v614
                  %v616 = vld [vmem:[%s608 + $0x30] sm:$0xff]
                  %617 = vst [vmem:[%s609 + $0x18] sm:$0xff] %v616
                  %v618 = vld [vmem:[%s608 + $0x40] sm:$0xff]
                  %619 = vst [vmem:[%s609 + $0x20] sm:$0xff] %v618
                  %v620 = vld [vmem:[%s608 + $0x50] sm:$0xff]
                  %621 = vst [vmem:[%s609 + $0x28] sm:$0xff] %v620
                  %v622 = vld [vmem:[%s608 + $0x60] sm:$0xff]
                  %623 = vst [vmem:[%s609 + $0x30] sm:$0xff] %v622
                  %v624 = vld [vmem:[%s608 + $0x70] sm:$0xff]
                  %625 = vst [vmem:[%s609 + $0x38] sm:$0xff] %v624
                  %v626 = vld [vmem:[%s608 + $0x80] sm:$0xff]
                  %627 = vst [vmem:[%s609 + $0x40] sm:$0xff] %v626
                  %v628 = vld [vmem:[%s608 + $0x90] sm:$0xff]
                  %629 = vst [vmem:[%s609 + $0x48] sm:$0xff] %v628
                $region138: #{tpu_custom_call.1} parent=132 // loop_footer
                  %s607 = sadd.s32 1, %s603
                $region139: #{tpu_custom_call.1} parent=132 // loop_footer_branch
                  %602 = sbr.rel target = $region135
                $region140: #{tpu_custom_call.1} parent=132 // loop_exit
                  _
              $region133: #{tpu_custom_call.1} parent=117 // pred_fallthru
                _
              // Predicated region
              $region141: #{tpu_custom_call.1} parent=117 // pred_check
                _
              $region142: #{tpu_custom_call.1} parent=117 // pred_check_branch
                %631 = sbr.rel target = $region144
              $region143: #{tpu_custom_call.1} parent=117 // pred_region
                _
              $region144: #{tpu_custom_call.1} parent=117 // pred_fallthru
                _
            $region118: #{tpu_custom_call.1} parent=113 // pred_fallthru
              _
            // Predicated region
            $region119: #{tpu_custom_call.1} parent=113 // pred_check
              _
            $region120: #{tpu_custom_call.1} parent=113 // pred_check_branch
              %570 = sbr.rel target = $region122
            $region121: #{tpu_custom_call.1} parent=113 // pred_region
              loop: start=0, step=1, limit=1
              $region123: #{tpu_custom_call.1} parent=121 // loop_pre_header
                _
              $region124: #{tpu_custom_call.1} parent=121 // loop_header
                %s573 = sphi 0, %s577
                %p574 = scmp.ge.s32.totalorder %s573, 1
                %s578 = sphi %s564, %s564
                %s579 = sphi %s562, %s562
              $region125: #{tpu_custom_call.1} parent=121 // loop_header_branch
                %576 = sbr.rel (%p574) target = $region129
              $region126: #{tpu_custom_call.1} parent=121 // loop_body
                %v580 = vld [vmem:[%s578] sm:$0xff]
                %581 = vst [vmem:[%s579] sm:$0xff] %v580
                %v582 = vld [vmem:[%s578 + $0x10] sm:$0xff]
                %583 = vst [vmem:[%s579 + $0x8] sm:$0xff] %v582
                %v584 = vld [vmem:[%s578 + $0x20] sm:$0xff]
                %585 = vst [vmem:[%s579 + $0x10] sm:$0xff] %v584
                %v586 = vld [vmem:[%s578 + $0x30] sm:$0xff]
                %587 = vst [vmem:[%s579 + $0x18] sm:$0xff] %v586
                %v588 = vld [vmem:[%s578 + $0x40] sm:$0xff]
                %589 = vst [vmem:[%s579 + $0x20] sm:$0xff] %v588
                %v590 = vld [vmem:[%s578 + $0x50] sm:$0xff]
                %591 = vst [vmem:[%s579 + $0x28] sm:$0xff] %v590
                %v592 = vld [vmem:[%s578 + $0x60] sm:$0xff]
                %593 = vst [vmem:[%s579 + $0x30] sm:$0xff] %v592
                %v594 = vld [vmem:[%s578 + $0x70] sm:$0xff]
                %595 = vst [vmem:[%s579 + $0x38] sm:$0xff] %v594
                %v596 = vld [vmem:[%s578 + $0x80] sm:$0xff]
                %597 = vst [vmem:[%s579 + $0x40] sm:$0xff] %v596
                %v598 = vld [vmem:[%s578 + $0x90] sm:$0xff]
                %599 = vst [vmem:[%s579 + $0x48] sm:$0xff] %v598
              $region127: #{tpu_custom_call.1} parent=121 // loop_footer
                %s577 = sadd.s32 1, %s573
              $region128: #{tpu_custom_call.1} parent=121 // loop_footer_branch
                %572 = sbr.rel target = $region124
              $region129: #{tpu_custom_call.1} parent=121 // loop_exit
                _
            $region122: #{tpu_custom_call.1} parent=113 // pred_fallthru
              _
          $region114: #{tpu_custom_call.1} parent=109 // pred_fallthru
            _
          %632 = vnop
        $region110: #{tpu_custom_call.1} parent=63 // pred_fallthru
          _
      $region64: #{tpu_custom_call.1} parent=5 // pred_fallthru
        _
      %p633 = scmp.le.s32.totalorder 1, %s28
      %p634 = scmp.lt.s32.totalorder %s28, 3
      %p635 = pnand %p633, %p634
      %p636 = pneg %p635
      // Predicated region
      $region145: #{tpu_custom_call.1} parent=5 // pred_check
        _
      $region146: #{tpu_custom_call.1} parent=5 // pred_check_branch
        %638 = sbr.rel (%p635) target = $region148
      $region147: #{tpu_custom_call.1} parent=5 // pred_region
        %s639 = ssub.s32 %s28, 1
        %s640 = sand.u32 %s41, 1
        %s641 = scalar_lea.sflag [#allocation3], %s640
        %s642 = sand.u32 %s41, 1
        %s643 = smul.addr %s642, 16
        %s644 = scalar_lea.vmem [#allocation2], %s643
        // Predicated region
        $region149: #{tpu_custom_call.1} parent=147 // pred_check
          %p645 = pneg %p54
        $region150: #{tpu_custom_call.1} parent=147 // pred_check_branch
          %647 = sbr.rel (%p645) target = $region152
        $region151: #{tpu_custom_call.1} parent=147 // pred_region
          %648 = dma.done %s641, 256
        $region152: #{tpu_custom_call.1} parent=147 // pred_fallthru
          _
        %s649 = sand.u32 %s67, 1
        %s650 = sand.u32 %s67, 1
        %s651 = smul.addr %s650, 80
        %s652 = scalar_lea.vmem [#allocation5], %s651
        // Predicated region
        $region153: #{tpu_custom_call.1} parent=147 // pred_check
          %p653 = pneg %p80
        $region154: #{tpu_custom_call.1} parent=147 // pred_check_branch
          %655 = sbr.rel (%p653) target = $region156
        $region155: #{tpu_custom_call.1} parent=147 // pred_region
          _
        $region156: #{tpu_custom_call.1} parent=147 // pred_fallthru
          _
        %s656 = sand.u32 %s93, 1
        %s657 = sand.u32 %s93, 1
        %s658 = smul.addr %s657, 80
        %s659 = scalar_lea.vmem [#allocation6], %s658
        // Predicated region
        $region157: #{tpu_custom_call.1} parent=147 // pred_check
          %p660 = pneg %p106
        $region158: #{tpu_custom_call.1} parent=147 // pred_check_branch
          %662 = sbr.rel (%p660) target = $region160
        $region159: #{tpu_custom_call.1} parent=147 // pred_region
          _
        $region160: #{tpu_custom_call.1} parent=147 // pred_fallthru
          _
        // Predicated region
        $region161: #{tpu_custom_call.1} parent=147 // pred_check
          %p663 = pneg %p253
        $region162: #{tpu_custom_call.1} parent=147 // pred_check_branch
          %665 = sbr.rel (%p663) target = $region164
        $region163: #{tpu_custom_call.1} parent=147 // pred_region
          %666 = dma.done [#allocation8], 1280
        $region164: #{tpu_custom_call.1} parent=147 // pred_fallthru
          _
        // Predicated region
        $region165: #{tpu_custom_call.1} parent=147 // pred_check
          %p667 = pneg %p295
        $region166: #{tpu_custom_call.1} parent=147 // pred_check_branch
          %669 = sbr.rel (%p667) target = $region168
        $region167: #{tpu_custom_call.1} parent=147 // pred_region
          %670 = dma.done [#allocation8], 512
        $region168: #{tpu_custom_call.1} parent=147 // pred_fallthru
          _
        %s671 = sand.u32 %s41, 1
        %s672 = scalar_lea.sflag [#allocation3], %s671
        %s673 = sand.u32 %s41, 1
        %s674 = smul.addr %s673, 16
        %s675 = scalar_lea.vmem [#allocation2], %s674
        %p676 = pneg %p54
        %p677 = pneg %p51
        %s678 = sand.u32 %s67, 1
        %s679 = sand.u32 %s67, 1
        %s680 = smul.addr %s679, 80
        %s681 = scalar_lea.vmem [#allocation5], %s680
        %p682 = pneg %p80
        %p683 = pneg %p77
        %s684 = sand.u32 %s93, 1
        %s685 = sand.u32 %s93, 1
        %s686 = smul.addr %s685, 80
        %s687 = scalar_lea.vmem [#allocation6], %s686
        %p688 = pneg %p106
        %p689 = pneg %p103
        %p690 = pneg %p127
        %p691 = pneg %p124
        %p692 = pneg %p148
        %p693 = pneg %p145
        %p694 = pneg %p169
        %p695 = pneg %p166
        %p696 = pneg %p190
        %p697 = pneg %p187
        %p698 = pneg %p211
        %p699 = pneg %p208
        %p700 = pneg %p232
        %p701 = pneg %p229
        %p702 = pneg %p253
        %p703 = pneg %p250
        %p704 = pneg %p274
        %p705 = pneg %p271
        %p706 = pneg %p295
        %p707 = pneg %p292
        %p708 = pneg %p316
        %p709 = pneg %p313
        %p710 = pneg %p337
        %p711 = pneg %p334
        %p712 = pneg %p358
        %p713 = pneg %p355
        %p714 = pneg %p384
        %p715 = pneg %p381
        %s716 = sand.u32 %s371, 1
        %s717 = scalar_lea.sflag [#allocation4], %s716
        %s718 = sand.u32 %s371, 1
        %s719 = smul.addr %s718, 8
        %s720 = scalar_lea.vmem [#allocation10], %s719
        %v721 = vld [vmem:[%s3] sm:$0xff]
        %v722 = vld [vmem:[%s3 + $0x8] sm:$0xff]
        %v723 = vld [vmem:[%s3 + $0x10] sm:$0xff]
        %v724 = vld [vmem:[%s3 + $0x18] sm:$0xff]
        %v725 = vld [vmem:[%s644] sm:$0xff]
        %v726 = vld [vmem:[%s644 + $0x8] sm:$0xff]
        %v727 = vld [vmem:[%s4] sm:$0xff]
        %v728 = vld [vmem:[%s4 + $0x8] sm:$0xff]
        %v729 = vld [vmem:[%s4 + $0x10] sm:$0xff]
        %v730 = vld [vmem:[%s4 + $0x18] sm:$0xff]
        %732 = vset.pattern.permute.xlu0 0
        %733 = vperm.xlu0 %732, %v727
        %v734 = vpop.permute.xlu0 %733
        %737 = vset.pattern.permute.xlu0 0
        %738 = vperm.xlu0 %737, %v728
        %v739 = vpop.permute.xlu0 %738
        %742 = vset.pattern.permute.xlu0 0
        %743 = vperm.xlu0 %742, %v729
        %v744 = vpop.permute.xlu0 %743
        %747 = vset.pattern.permute.xlu0 0
        %748 = vperm.xlu0 %747, %v730
        %v749 = vpop.permute.xlu0 %748
        %vm751 = vcmask 130048
        %v753 = vsel %vm751, %v721, 0
        %v756 = vsel %vm751, %v722, 0
        %v759 = vsel %vm751, %v723, 0
        %v762 = vsel %vm751, %v724, 0
        %764 = vmatprep.subr.mxu0 0.0
        %765 = vmatpush1.msra.mxu0 %v725
        %766 = vmatprep.subr.mxu0 0.0
        %767 = vmatpush1.msra.mxu0 %v726
        %768 = vmatprep.subr.mxu0 0.0
        %769 = vmatpush1.msra.mxu0 0.0
        %770 = vmatprep.subr.mxu0 0.0
        %771 = vmatpush1.msra.mxu0 0.0
        %772 = vmatprep.subr.mxu0 0.0
        %773 = vmatpush1.msra.mxu0 0.0
        %774 = vmatprep.subr.mxu0 0.0
        %775 = vmatpush1.msra.mxu0 0.0
        %776 = vmatprep.subr.mxu0 0.0
        %777 = vmatpush1.msra.mxu0 0.0
        %778 = vmatprep.subr.mxu0 0.0
        %779 = vmatpush1.msra.mxu0 0.0
        %780 = vmatprep.subr.mxu0 0.0
        %781 = vmatpush1.msra.mxu0 0.0
        %782 = vmatprep.subr.mxu0 0.0
        %783 = vmatpush1.msra.mxu0 0.0
        %784 = vmatprep.subr.mxu0 0.0
        %785 = vmatpush1.msra.mxu0 0.0
        %786 = vmatprep.subr.mxu0 0.0
        %787 = vmatpush1.msra.mxu0 0.0
        %788 = vmatprep.subr.mxu0 0.0
        %789 = vmatpush1.msra.mxu0 0.0
        %790 = vmatprep.subr.mxu0 0.0
        %791 = vmatpush1.msra.mxu0 0.0
        %792 = vmatprep.subr.mxu0 0.0
        %793 = vmatpush1.msra.mxu0 0.0
        %794 = vmatprep.subr.mxu0 0.0
        %795 = vmatpush1.msra.mxu0 0.0
        %796 = vmatprep.subr.mxu0 0.0
        %797 = vmatpush1.msra.mxu0 0.0
        %798 = vmatprep.subr.mxu0 0.0
        %799 = vmatpush1.msra.mxu0 0.0
        %800 = vmatprep.subr.mxu0 0.0
        %801 = vmatpush1.msra.mxu0 0.0
        %802 = vmatprep.subr.mxu0 0.0
        %803 = vmatpush1.msra.mxu0 0.0
        %804 = vmatprep.subr.mxu0 0.0
        %805 = vmatpush1.msra.mxu0 0.0
        %806 = vmatprep.subr.mxu0 0.0
        %807 = vmatpush1.msra.mxu0 0.0
        %808 = vmatprep.subr.mxu0 0.0
        %809 = vmatpush1.msra.mxu0 0.0
        %810 = vmatprep.subr.mxu0 0.0
        %811 = vmatpush1.msra.mxu0 0.0
        %812 = vmatprep.subr.mxu0 0.0
        %813 = vmatpush1.msra.mxu0 0.0
        %814 = vmatprep.subr.mxu0 0.0
        %815 = vmatpush1.msra.mxu0 0.0
        %816 = vmatprep.subr.mxu0 0.0
        %817 = vmatpush1.msra.mxu0 0.0
        %818 = vmatprep.subr.mxu0 0.0
        %819 = vmatpush1.msra.mxu0 0.0
        %820 = vmatprep.subr.mxu0 0.0
        %821 = vmatpush1.msra.mxu0 0.0
        %822 = vmatprep.subr.mxu0 0.0
        %823 = vmatpush1.msra.mxu0 0.0
        %824 = vmatprep.subr.mxu0 0.0
        %825 = vmatpush1.msra.mxu0 0.0
        %826 = vmatprep.subr.mxu0 0.0
        %827 = vmatpush1.msra.mxu0 0.0
        %828 = vmatprep.mubr.f32.mxu0 0.0
        %829 = vmatmul.mubr.f32.gmra.mrb[0].mxu0 %v753
        %v830 = vpop.f32.mrb[0].mxu0
        %v831 = vadd.f32 %v734, %v830
        %v832 = vpop.f32.mrb[0].mxu0
        %833 = vmatprep.mubr.f32.mxu0 0.0
        %834 = vmatmul.mubr.f32.gmra.mrb[0].mxu0 %v756
        %v835 = vpop.f32.mrb[0].mxu0
        %v836 = vadd.f32 %v739, %v835
        %v837 = vpop.f32.mrb[0].mxu0
        %838 = vmatprep.mubr.f32.mxu0 0.0
        %839 = vmatmul.mubr.f32.gmra.mrb[0].mxu0 %v759
        %v840 = vpop.f32.mrb[0].mxu0
        %v841 = vadd.f32 %v744, %v840
        %v842 = vpop.f32.mrb[0].mxu0
        %843 = vmatprep.mubr.f32.mxu0 0.0
        %844 = vmatmul.mubr.f32.gmra.mrb[0].mxu0 %v762
        %v845 = vpop.f32.mrb[0].mxu0
        %v846 = vadd.f32 %v749, %v845
        %v847 = vpop.f32.mrb[0].mxu0
        %848 = vdwg.mxu0
        %v849 = vld [vmem:[%s5] sm:$0xff]
        %v850 = vld [vmem:[%s5 + $0x8] sm:$0xff]
        %v851 = vld [vmem:[%s5 + $0x10] sm:$0xff]
        %v852 = vld [vmem:[%s5 + $0x18] sm:$0xff]
        %v853 = vld [vmem:[%s5 + $0x20] sm:$0xff]
        %v854 = vld [vmem:[%s5 + $0x28] sm:$0xff]
        %v855 = vld [vmem:[%s5 + $0x30] sm:$0xff]
        %v856 = vld [vmem:[%s5 + $0x38] sm:$0xff]
        %v857 = vld [vmem:[%s5 + $0x40] sm:$0xff]
        %v858 = vld [vmem:[%s5 + $0x48] sm:$0xff]
        %v859 = vld [vmem:[%s5 + $0x50] sm:$0xff]
        %v860 = vld [vmem:[%s5 + $0x58] sm:$0xff]
        %v861 = vld [vmem:[%s5 + $0x60] sm:$0xff]
        %v862 = vld [vmem:[%s5 + $0x68] sm:$0xff]
        %v863 = vld [vmem:[%s5 + $0x70] sm:$0xff]
        %v864 = vld [vmem:[%s5 + $0x78] sm:$0xff]
        %v865 = vld [vmem:[%s5 + $0x80] sm:$0xff]
        %v866 = vld [vmem:[%s5 + $0x88] sm:$0xff]
        %v867 = vld [vmem:[%s5 + $0x90] sm:$0xff]
        %v868 = vld [vmem:[%s5 + $0x98] sm:$0xff]
        %v869 = vld [vmem:[%s652] sm:$0xff]
        %v870 = vld [vmem:[%s652 + $0x8] sm:$0xff]
        %v871 = vld [vmem:[%s652 + $0x10] sm:$0xff]
        %v872 = vld [vmem:[%s652 + $0x18] sm:$0xff]
        %v873 = vld [vmem:[%s652 + $0x20] sm:$0xff]
        %v874 = vld [vmem:[%s652 + $0x28] sm:$0xff]
        %v875 = vld [vmem:[%s652 + $0x30] sm:$0xff]
        %v876 = vld [vmem:[%s652 + $0x38] sm:$0xff]
        %v877 = vld [vmem:[%s652 + $0x40] sm:$0xff]
        %v878 = vld [vmem:[%s652 + $0x48] sm:$0xff]
        %v879 = vld [vmem:[%s6] sm:$0xff]
        %v880 = vld [vmem:[%s6 + $0x8] sm:$0xff]
        %v881 = vld [vmem:[%s6 + $0x10] sm:$0xff]
        %v882 = vld [vmem:[%s6 + $0x18] sm:$0xff]
        %v883 = vld [vmem:[%s6 + $0x20] sm:$0xff]
        %v884 = vld [vmem:[%s6 + $0x28] sm:$0xff]
        %v885 = vld [vmem:[%s6 + $0x30] sm:$0xff]
        %v886 = vld [vmem:[%s6 + $0x38] sm:$0xff]
        %v887 = vld [vmem:[%s6 + $0x40] sm:$0xff]
        %v888 = vld [vmem:[%s6 + $0x48] sm:$0xff]
        %v889 = vld [vmem:[%s6 + $0x50] sm:$0xff]
        %v890 = vld [vmem:[%s6 + $0x58] sm:$0xff]
        %v891 = vld [vmem:[%s6 + $0x60] sm:$0xff]
        %v892 = vld [vmem:[%s6 + $0x68] sm:$0xff]
        %v893 = vld [vmem:[%s6 + $0x70] sm:$0xff]
        %v894 = vld [vmem:[%s6 + $0x78] sm:$0xff]
        %v895 = vld [vmem:[%s6 + $0x80] sm:$0xff]
        %v896 = vld [vmem:[%s6 + $0x88] sm:$0xff]
        %v897 = vld [vmem:[%s6 + $0x90] sm:$0xff]
        %v898 = vld [vmem:[%s6 + $0x98] sm:$0xff]
        %900 = vset.pattern.permute.xlu0 0
        %901 = vperm.xlu0 %900, %v879
        %v902 = vpop.permute.xlu0 %901
        %905 = vset.pattern.permute.xlu0 0
        %906 = vperm.xlu0 %905, %v880
        %v907 = vpop.permute.xlu0 %906
        %910 = vset.pattern.permute.xlu0 0
        %911 = vperm.xlu0 %910, %v881
        %v912 = vpop.permute.xlu0 %911
        %915 = vset.pattern.permute.xlu0 0
        %916 = vperm.xlu0 %915, %v882
        %v917 = vpop.permute.xlu0 %916
        %920 = vset.pattern.permute.xlu0 0
        %921 = vperm.xlu0 %920, %v883
        %v922 = vpop.permute.xlu0 %921
        %925 = vset.pattern.permute.xlu0 0
        %926 = vperm.xlu0 %925, %v884
        %v927 = vpop.permute.xlu0 %926
        %930 = vset.pattern.permute.xlu0 0
        %931 = vperm.xlu0 %930, %v885
        %v932 = vpop.permute.xlu0 %931
        %935 = vset.pattern.permute.xlu0 0
        %936 = vperm.xlu0 %935, %v886
        %v937 = vpop.permute.xlu0 %936
        %940 = vset.pattern.permute.xlu0 0
        %941 = vperm.xlu0 %940, %v887
        %v942 = vpop.permute.xlu0 %941
        %945 = vset.pattern.permute.xlu0 0
        %946 = vperm.xlu0 %945, %v888
        %v947 = vpop.permute.xlu0 %946
        %950 = vset.pattern.permute.xlu0 0
        %951 = vperm.xlu0 %950, %v889
        %v952 = vpop.permute.xlu0 %951
        %955 = vset.pattern.permute.xlu0 0
        %956 = vperm.xlu0 %955, %v890
        %v957 = vpop.permute.xlu0 %956
        %960 = vset.pattern.permute.xlu0 0
        %961 = vperm.xlu0 %960, %v891
        %v962 = vpop.permute.xlu0 %961
        %965 = vset.pattern.permute.xlu0 0
        %966 = vperm.xlu0 %965, %v892
        %v967 = vpop.permute.xlu0 %966
        %970 = vset.pattern.permute.xlu0 0
        %971 = vperm.xlu0 %970, %v893
        %v972 = vpop.permute.xlu0 %971
        %975 = vset.pattern.permute.xlu0 0
        %976 = vperm.xlu0 %975, %v894
        %v977 = vpop.permute.xlu0 %976
        %980 = vset.pattern.permute.xlu0 0
        %981 = vperm.xlu0 %980, %v895
        %v982 = vpop.permute.xlu0 %981
        %985 = vset.pattern.permute.xlu0 0
        %986 = vperm.xlu0 %985, %v896
        %v987 = vpop.permute.xlu0 %986
        %990 = vset.pattern.permute.xlu0 0
        %991 = vperm.xlu0 %990, %v897
        %v992 = vpop.permute.xlu0 %991
        %995 = vset.pattern.permute.xlu0 0
        %996 = vperm.xlu0 %995, %v898
        %v997 = vpop.permute.xlu0 %996
        %vm999 = vcmask 654336
        %v1001 = vsel %vm999, %v849, 0
        %v1004 = vsel %vm999, %v850, 0
        %v1007 = vsel %vm999, %v851, 0
        %v1010 = vsel %vm999, %v852, 0
        %v1013 = vsel %vm999, %v853, 0
        %v1016 = vsel %vm999, %v854, 0
        %v1019 = vsel %vm999, %v855, 0
        %v1022 = vsel %vm999, %v856, 0
        %v1025 = vsel %vm999, %v857, 0
        %v1028 = vsel %vm999, %v858, 0
        %v1031 = vsel %vm999, %v859, 0
        %v1034 = vsel %vm999, %v860, 0
        %v1037 = vsel %vm999, %v861, 0
        %v1040 = vsel %vm999, %v862, 0
        %v1043 = vsel %vm999, %v863, 0
        %v1046 = vsel %vm999, %v864, 0
        %v1049 = vsel %vm999, %v865, 0
        %v1052 = vsel %vm999, %v866, 0
        %v1055 = vsel %vm999, %v867, 0
        %v1058 = vsel %vm999, %v868, 0
        %1060 = vmatprep.subr.mxu0 0.0
        %1061 = vmatpush1.msra.mxu0 %v869
        %1062 = vmatprep.subr.mxu0 0.0
        %1063 = vmatpush1.msra.mxu0 %v870
        %1064 = vmatprep.subr.mxu0 0.0
        %1065 = vmatpush1.msra.mxu0 %v871
        %1066 = vmatprep.subr.mxu0 0.0
        %1067 = vmatpush1.msra.mxu0 %v872
        %1068 = vmatprep.subr.mxu0 0.0
        %1069 = vmatpush1.msra.mxu0 %v873
        %1070 = vmatprep.subr.mxu0 0.0
        %1071 = vmatpush1.msra.mxu0 %v874
        %1072 = vmatprep.subr.mxu0 0.0
        %1073 = vmatpush1.msra.mxu0 %v875
        %1074 = vmatprep.subr.mxu0 0.0
        %1075 = vmatpush1.msra.mxu0 %v876
        %1076 = vmatprep.subr.mxu0 0.0
        %1077 = vmatpush1.msra.mxu0 %v877
        %1078 = vmatprep.subr.mxu0 0.0
        %1079 = vmatpush1.msra.mxu0 %v878
        %1080 = vmatprep.subr.mxu0 0.0
        %1081 = vmatpush1.msra.mxu0 0.0
        %1082 = vmatprep.subr.mxu0 0.0
        %1083 = vmatpush1.msra.mxu0 0.0
        %1084 = vmatprep.subr.mxu0 0.0
        %1085 = vmatpush1.msra.mxu0 0.0
        %1086 = vmatprep.subr.mxu0 0.0
        %1087 = vmatpush1.msra.mxu0 0.0
        %1088 = vmatprep.subr.mxu0 0.0
        %1089 = vmatpush1.msra.mxu0 0.0
        %1090 = vmatprep.subr.mxu0 0.0
        %1091 = vmatpush1.msra.mxu0 0.0
        %1092 = vmatprep.subr.mxu0 0.0
        %1093 = vmatpush1.msra.mxu0 0.0
        %1094 = vmatprep.subr.mxu0 0.0
        %1095 = vmatpush1.msra.mxu0 0.0
        %1096 = vmatprep.subr.mxu0 0.0
        %1097 = vmatpush1.msra.mxu0 0.0
        %1098 = vmatprep.subr.mxu0 0.0
        %1099 = vmatpush1.msra.mxu0 0.0
        %1100 = vmatprep.subr.mxu0 0.0
        %1101 = vmatpush1.msra.mxu0 0.0
        %1102 = vmatprep.subr.mxu0 0.0
        %1103 = vmatpush1.msra.mxu0 0.0
        %1104 = vmatprep.subr.mxu0 0.0
        %1105 = vmatpush1.msra.mxu0 0.0
        %1106 = vmatprep.subr.mxu0 0.0
        %1107 = vmatpush1.msra.mxu0 0.0
        %1108 = vmatprep.subr.mxu0 0.0
        %1109 = vmatpush1.msra.mxu0 0.0
        %1110 = vmatprep.subr.mxu0 0.0
        %1111 = vmatpush1.msra.mxu0 0.0
        %1112 = vmatprep.subr.mxu0 0.0
        %1113 = vmatpush1.msra.mxu0 0.0
        %1114 = vmatprep.subr.mxu0 0.0
        %1115 = vmatpush1.msra.mxu0 0.0
        %1116 = vmatprep.subr.mxu0 0.0
        %1117 = vmatpush1.msra.mxu0 0.0
        %1118 = vmatprep.subr.mxu0 0.0
        %1119 = vmatpush1.msra.mxu0 0.0
        %1120 = vmatprep.subr.mxu0 0.0
        %1121 = vmatpush1.msra.mxu0 0.0
        %1122 = vmatprep.subr.mxu0 0.0
        %1123 = vmatpush1.msra.mxu0 0.0
        %1124 = vmatprep.mubr.f32.mxu0 0.0
        %1125 = vmatmul.mubr.f32.gmra.mrb[0].mxu0 %v1001
        %v1126 = vpop.f32.mrb[0].mxu0
        %v1127 = vadd.f32 %v902, %v1126
        %v1128 = vpop.f32.mrb[0].mxu0
        %1129 = vmatprep.mubr.f32.mxu0 0.0
        %1130 = vmatmul.mubr.f32.gmra.mrb[0].mxu0 %v1004
        %v1131 = vpop.f32.mrb[0].mxu0
        %v1132 = vadd.f32 %v907, %v1131
        %v1133 = vpop.f32.mrb[0].mxu0
        %1134 = vmatprep.mubr.f32.mxu0 0.0
        %1135 = vmatmul.mubr.f32.gmra.mrb[0].mxu0 %v1007
        %v1136 = vpop.f32.mrb[0].mxu0
        %v1137 = vadd.f32 %v912, %v1136
        %v1138 = vpop.f32.mrb[0].mxu0
        %1139 = vmatprep.mubr.f32.mxu0 0.0
        %1140 = vmatmul.mubr.f32.gmra.mrb[0].mxu0 %v1010
        %v1141 = vpop.f32.mrb[0].mxu0
        %v1142 = vadd.f32 %v917, %v1141
        %v1143 = vpop.f32.mrb[0].mxu0
        %1144 = vmatprep.mubr.f32.mxu0 0.0
        %1145 = vmatmul.mubr.f32.gmra.mrb[0].mxu0 %v1013
        %v1146 = vpop.f32.mrb[0].mxu0
        %v1147 = vadd.f32 %v922, %v1146
        %v1148 = vpop.f32.mrb[0].mxu0
        %1149 = vmatprep.mubr.f32.mxu0 0.0
        %1150 = vmatmul.mubr.f32.gmra.mrb[0].mxu0 %v1016
        %v1151 = vpop.f32.mrb[0].mxu0
        %v1152 = vadd.f32 %v927, %v1151
        %v1153 = vpop.f32.mrb[0].mxu0
        %1154 = vmatprep.mubr.f32.mxu0 0.0
        %1155 = vmatmul.mubr.f32.gmra.mrb[0].mxu0 %v1019
        %v1156 = vpop.f32.mrb[0].mxu0
        %v1157 = vadd.f32 %v932, %v1156
        %v1158 = vpop.f32.mrb[0].mxu0
        %1159 = vmatprep.mubr.f32.mxu0 0.0
        %1160 = vmatmul.mubr.f32.gmra.mrb[0].mxu0 %v1022
        %v1161 = vpop.f32.mrb[0].mxu0
        %v1162 = vadd.f32 %v937, %v1161
        %v1163 = vpop.f32.mrb[0].mxu0
        %1164 = vmatprep.mubr.f32.mxu0 0.0
        %1165 = vmatmul.mubr.f32.gmra.mrb[0].mxu0 %v1025
        %v1166 = vpop.f32.mrb[0].mxu0
        %v1167 = vadd.f32 %v942, %v1166
        %v1168 = vpop.f32.mrb[0].mxu0
        %1169 = vmatprep.mubr.f32.mxu0 0.0
        %1170 = vmatmul.mubr.f32.gmra.mrb[0].mxu0 %v1028
        %v1171 = vpop.f32.mrb[0].mxu0
        %v1172 = vadd.f32 %v947, %v1171
        %v1173 = vpop.f32.mrb[0].mxu0
        %1174 = vmatprep.mubr.f32.mxu0 0.0
        %1175 = vmatmul.mubr.f32.gmra.mrb[0].mxu0 %v1031
        %v1176 = vpop.f32.mrb[0].mxu0
        %v1177 = vadd.f32 %v952, %v1176
        %v1178 = vpop.f32.mrb[0].mxu0
        %1179 = vmatprep.mubr.f32.mxu0 0.0
        %1180 = vmatmul.mubr.f32.gmra.mrb[0].mxu0 %v1034
        %v1181 = vpop.f32.mrb[0].mxu0
        %v1182 = vadd.f32 %v957, %v1181
        %v1183 = vpop.f32.mrb[0].mxu0
        %1184 = vmatprep.mubr.f32.mxu0 0.0
        %1185 = vmatmul.mubr.f32.gmra.mrb[0].mxu0 %v1037
        %v1186 = vpop.f32.mrb[0].mxu0
        %v1187 = vadd.f32 %v962, %v1186
        %v1188 = vpop.f32.mrb[0].mxu0
        %1189 = vmatprep.mubr.f32.mxu0 0.0
        %1190 = vmatmul.mubr.f32.gmra.mrb[0].mxu0 %v1040
        %v1191 = vpop.f32.mrb[0].mxu0
        %v1192 = vadd.f32 %v967, %v1191
        %v1193 = vpop.f32.mrb[0].mxu0
        %1194 = vmatprep.mubr.f32.mxu0 0.0
        %1195 = vmatmul.mubr.f32.gmra.mrb[0].mxu0 %v1043
        %v1196 = vpop.f32.mrb[0].mxu0
        %v1197 = vadd.f32 %v972, %v1196
        %v1198 = vpop.f32.mrb[0].mxu0
        %1199 = vmatprep.mubr.f32.mxu0 0.0
        %1200 = vmatmul.mubr.f32.gmra.mrb[0].mxu0 %v1046
        %v1201 = vpop.f32.mrb[0].mxu0
        %v1202 = vadd.f32 %v977, %v1201
        %v1203 = vpop.f32.mrb[0].mxu0
        %1204 = vmatprep.mubr.f32.mxu0 0.0
        %1205 = vmatmul.mubr.f32.gmra.mrb[0].mxu0 %v1049
        %v1206 = vpop.f32.mrb[0].mxu0
        %v1207 = vadd.f32 %v982, %v1206
        %v1208 = vpop.f32.mrb[0].mxu0
        %1209 = vmatprep.mubr.f32.mxu0 0.0
        %1210 = vmatmul.mubr.f32.gmra.mrb[0].mxu0 %v1052
        %v1211 = vpop.f32.mrb[0].mxu0
        %v1212 = vadd.f32 %v987, %v1211
        %v1213 = vpop.f32.mrb[0].mxu0
        %1214 = vmatprep.mubr.f32.mxu0 0.0
        %1215 = vmatmul.mubr.f32.gmra.mrb[0].mxu0 %v1055
        %v1216 = vpop.f32.mrb[0].mxu0
        %v1217 = vadd.f32 %v992, %v1216
        %v1218 = vpop.f32.mrb[0].mxu0
        %1219 = vmatprep.mubr.f32.mxu0 0.0
        %1220 = vmatmul.mubr.f32.gmra.mrb[0].mxu0 %v1058
        %v1221 = vpop.f32.mrb[0].mxu0
        %v1222 = vadd.f32 %v997, %v1221
        %v1223 = vpop.f32.mrb[0].mxu0
        %1224 = vdwg.mxu0
        %v1225 = vld [vmem:[%s7] sm:$0xff]
        %v1226 = vld [vmem:[%s7 + $0x8] sm:$0xff]
        %v1227 = vld [vmem:[%s7 + $0x10] sm:$0xff]
        %v1228 = vld [vmem:[%s7 + $0x18] sm:$0xff]
        %v1229 = vld [vmem:[%s7 + $0x20] sm:$0xff]
        %v1230 = vld [vmem:[%s7 + $0x28] sm:$0xff]
        %v1231 = vld [vmem:[%s7 + $0x30] sm:$0xff]
        %v1232 = vld [vmem:[%s7 + $0x38] sm:$0xff]
        %v1233 = vld [vmem:[%s7 + $0x40] sm:$0xff]
        %v1234 = vld [vmem:[%s7 + $0x48] sm:$0xff]
        %v1235 = vld [vmem:[%s7 + $0x50] sm:$0xff]
        %v1236 = vld [vmem:[%s7 + $0x58] sm:$0xff]
        %v1237 = vld [vmem:[%s7 + $0x60] sm:$0xff]
        %v1238 = vld [vmem:[%s7 + $0x68] sm:$0xff]
        %v1239 = vld [vmem:[%s7 + $0x70] sm:$0xff]
        %v1240 = vld [vmem:[%s7 + $0x78] sm:$0xff]
        %v1241 = vld [vmem:[%s7 + $0x80] sm:$0xff]
        %v1242 = vld [vmem:[%s7 + $0x88] sm:$0xff]
        %v1243 = vld [vmem:[%s7 + $0x90] sm:$0xff]
        %v1244 = vld [vmem:[%s7 + $0x98] sm:$0xff]
        %v1245 = vld [vmem:[%s659] sm:$0xff]
        %v1246 = vld [vmem:[%s659 + $0x8] sm:$0xff]
        %v1247 = vld [vmem:[%s659 + $0x10] sm:$0xff]
        %v1248 = vld [vmem:[%s659 + $0x18] sm:$0xff]
        %v1249 = vld [vmem:[%s659 + $0x20] sm:$0xff]
        %v1250 = vld [vmem:[%s659 + $0x28] sm:$0xff]
        %v1251 = vld [vmem:[%s659 + $0x30] sm:$0xff]
        %v1252 = vld [vmem:[%s659 + $0x38] sm:$0xff]
        %v1253 = vld [vmem:[%s659 + $0x40] sm:$0xff]
        %v1254 = vld [vmem:[%s659 + $0x48] sm:$0xff]
        %v1255 = vld [vmem:[%s8] sm:$0xff]
        %v1256 = vld [vmem:[%s8 + $0x8] sm:$0xff]
        %v1257 = vld [vmem:[%s8 + $0x10] sm:$0xff]
        %v1258 = vld [vmem:[%s8 + $0x18] sm:$0xff]
        %v1259 = vld [vmem:[%s8 + $0x20] sm:$0xff]
        %v1260 = vld [vmem:[%s8 + $0x28] sm:$0xff]
        %v1261 = vld [vmem:[%s8 + $0x30] sm:$0xff]
        %v1262 = vld [vmem:[%s8 + $0x38] sm:$0xff]
        %v1263 = vld [vmem:[%s8 + $0x40] sm:$0xff]
        %v1264 = vld [vmem:[%s8 + $0x48] sm:$0xff]
        %v1265 = vld [vmem:[%s8 + $0x50] sm:$0xff]
        %v1266 = vld [vmem:[%s8 + $0x58] sm:$0xff]
        %v1267 = vld [vmem:[%s8 + $0x60] sm:$0xff]
        %v1268 = vld [vmem:[%s8 + $0x68] sm:$0xff]
        %v1269 = vld [vmem:[%s8 + $0x70] sm:$0xff]
        %v1270 = vld [vmem:[%s8 + $0x78] sm:$0xff]
        %v1271 = vld [vmem:[%s8 + $0x80] sm:$0xff]
        %v1272 = vld [vmem:[%s8 + $0x88] sm:$0xff]
        %v1273 = vld [vmem:[%s8 + $0x90] sm:$0xff]
        %v1274 = vld [vmem:[%s8 + $0x98] sm:$0xff]
        %1276 = vset.pattern.permute.xlu0 0
        %1277 = vperm.xlu0 %1276, %v1255
        %v1278 = vpop.permute.xlu0 %1277
        %1281 = vset.pattern.permute.xlu0 0
        %1282 = vperm.xlu0 %1281, %v1256
        %v1283 = vpop.permute.xlu0 %1282
        %1286 = vset.pattern.permute.xlu0 0
        %1287 = vperm.xlu0 %1286, %v1257
        %v1288 = vpop.permute.xlu0 %1287
        %1291 = vset.pattern.permute.xlu0 0
        %1292 = vperm.xlu0 %1291, %v1258
        %v1293 = vpop.permute.xlu0 %1292
        %1296 = vset.pattern.permute.xlu0 0
        %1297 = vperm.xlu0 %1296, %v1259
        %v1298 = vpop.permute.xlu0 %1297
        %1301 = vset.pattern.permute.xlu0 0
        %1302 = vperm.xlu0 %1301, %v1260
        %v1303 = vpop.permute.xlu0 %1302
        %1306 = vset.pattern.permute.xlu0 0
        %1307 = vperm.xlu0 %1306, %v1261
        %v1308 = vpop.permute.xlu0 %1307
        %1311 = vset.pattern.permute.xlu0 0
        %1312 = vperm.xlu0 %1311, %v1262
        %v1313 = vpop.permute.xlu0 %1312
        %1316 = vset.pattern.permute.xlu0 0
        %1317 = vperm.xlu0 %1316, %v1263
        %v1318 = vpop.permute.xlu0 %1317
        %1321 = vset.pattern.permute.xlu0 0
        %1322 = vperm.xlu0 %1321, %v1264
        %v1323 = vpop.permute.xlu0 %1322
        %1326 = vset.pattern.permute.xlu0 0
        %1327 = vperm.xlu0 %1326, %v1265
        %v1328 = vpop.permute.xlu0 %1327
        %1331 = vset.pattern.permute.xlu0 0
        %1332 = vperm.xlu0 %1331, %v1266
        %v1333 = vpop.permute.xlu0 %1332
        %1336 = vset.pattern.permute.xlu0 0
        %1337 = vperm.xlu0 %1336, %v1267
        %v1338 = vpop.permute.xlu0 %1337
        %1341 = vset.pattern.permute.xlu0 0
        %1342 = vperm.xlu0 %1341, %v1268
        %v1343 = vpop.permute.xlu0 %1342
        %1346 = vset.pattern.permute.xlu0 0
        %1347 = vperm.xlu0 %1346, %v1269
        %v1348 = vpop.permute.xlu0 %1347
        %1351 = vset.pattern.permute.xlu0 0
        %1352 = vperm.xlu0 %1351, %v1270
        %v1353 = vpop.permute.xlu0 %1352
        %1356 = vset.pattern.permute.xlu0 0
        %1357 = vperm.xlu0 %1356, %v1271
        %v1358 = vpop.permute.xlu0 %1357
        %1361 = vset.pattern.permute.xlu0 0
        %1362 = vperm.xlu0 %1361, %v1272
        %v1363 = vpop.permute.xlu0 %1362
        %1366 = vset.pattern.permute.xlu0 0
        %1367 = vperm.xlu0 %1366, %v1273
        %v1368 = vpop.permute.xlu0 %1367
        %1371 = vset.pattern.permute.xlu0 0
        %1372 = vperm.xlu0 %1371, %v1274
        %v1373 = vpop.permute.xlu0 %1372
        %v1376 = vsel %vm999, %v1225, 0
        %v1379 = vsel %vm999, %v1226, 0
        %v1382 = vsel %vm999, %v1227, 0
        %v1385 = vsel %vm999, %v1228, 0
        %v1388 = vsel %vm999, %v1229, 0
        %v1391 = vsel %vm999, %v1230, 0
        %v1394 = vsel %vm999, %v1231, 0
        %v1397 = vsel %vm999, %v1232, 0
        %v1400 = vsel %vm999, %v1233, 0
        %v1403 = vsel %vm999, %v1234, 0
        %v1406 = vsel %vm999, %v1235, 0
        %v1409 = vsel %vm999, %v1236, 0
        %v1412 = vsel %vm999, %v1237, 0
        %v1415 = vsel %vm999, %v1238, 0
        %v1418 = vsel %vm999, %v1239, 0
        %v1421 = vsel %vm999, %v1240, 0
        %v1424 = vsel %vm999, %v1241, 0
        %v1427 = vsel %vm999, %v1242, 0
        %v1430 = vsel %vm999, %v1243, 0
        %v1433 = vsel %vm999, %v1244, 0
        %1435 = vmatprep.subr.mxu0 0.0
        %1436 = vmatpush1.msra.mxu0 %v1245
        %1437 = vmatprep.subr.mxu0 0.0
        %1438 = vmatpush1.msra.mxu0 %v1246
        %1439 = vmatprep.subr.mxu0 0.0
        %1440 = vmatpush1.msra.mxu0 %v1247
        %1441 = vmatprep.subr.mxu0 0.0
        %1442 = vmatpush1.msra.mxu0 %v1248
        %1443 = vmatprep.subr.mxu0 0.0
        %1444 = vmatpush1.msra.mxu0 %v1249
        %1445 = vmatprep.subr.mxu0 0.0
        %1446 = vmatpush1.msra.mxu0 %v1250
        %1447 = vmatprep.subr.mxu0 0.0
        %1448 = vmatpush1.msra.mxu0 %v1251
        %1449 = vmatprep.subr.mxu0 0.0
        %1450 = vmatpush1.msra.mxu0 %v1252
        %1451 = vmatprep.subr.mxu0 0.0
        %1452 = vmatpush1.msra.mxu0 %v1253
        %1453 = vmatprep.subr.mxu0 0.0
        %1454 = vmatpush1.msra.mxu0 %v1254
        %1455 = vmatprep.subr.mxu0 0.0
        %1456 = vmatpush1.msra.mxu0 0.0
        %1457 = vmatprep.subr.mxu0 0.0
        %1458 = vmatpush1.msra.mxu0 0.0
        %1459 = vmatprep.subr.mxu0 0.0
        %1460 = vmatpush1.msra.mxu0 0.0
        %1461 = vmatprep.subr.mxu0 0.0
        %1462 = vmatpush1.msra.mxu0 0.0
        %1463 = vmatprep.subr.mxu0 0.0
        %1464 = vmatpush1.msra.mxu0 0.0
        %1465 = vmatprep.subr.mxu0 0.0
        %1466 = vmatpush1.msra.mxu0 0.0
        %1467 = vmatprep.subr.mxu0 0.0
        %1468 = vmatpush1.msra.mxu0 0.0
        %1469 = vmatprep.subr.mxu0 0.0
        %1470 = vmatpush1.msra.mxu0 0.0
        %1471 = vmatprep.subr.mxu0 0.0
        %1472 = vmatpush1.msra.mxu0 0.0
        %1473 = vmatprep.subr.mxu0 0.0
        %1474 = vmatpush1.msra.mxu0 0.0
        %1475 = vmatprep.subr.mxu0 0.0
        %1476 = vmatpush1.msra.mxu0 0.0
        %1477 = vmatprep.subr.mxu0 0.0
        %1478 = vmatpush1.msra.mxu0 0.0
        %1479 = vmatprep.subr.mxu0 0.0
        %1480 = vmatpush1.msra.mxu0 0.0
        %1481 = vmatprep.subr.mxu0 0.0
        %1482 = vmatpush1.msra.mxu0 0.0
        %1483 = vmatprep.subr.mxu0 0.0
        %1484 = vmatpush1.msra.mxu0 0.0
        %1485 = vmatprep.subr.mxu0 0.0
        %1486 = vmatpush1.msra.mxu0 0.0
        %1487 = vmatprep.subr.mxu0 0.0
        %1488 = vmatpush1.msra.mxu0 0.0
        %1489 = vmatprep.subr.mxu0 0.0
        %1490 = vmatpush1.msra.mxu0 0.0
        %1491 = vmatprep.subr.mxu0 0.0
        %1492 = vmatpush1.msra.mxu0 0.0
        %1493 = vmatprep.subr.mxu0 0.0
        %1494 = vmatpush1.msra.mxu0 0.0
        %1495 = vmatprep.subr.mxu0 0.0
        %1496 = vmatpush1.msra.mxu0 0.0
        %1497 = vmatprep.subr.mxu0 0.0
        %1498 = vmatpush1.msra.mxu0 0.0
        %1499 = vmatprep.mubr.f32.mxu0 0.0
        %1500 = vmatmul.mubr.f32.gmra.mrb[0].mxu0 %v1376
        %v1501 = vpop.f32.mrb[0].mxu0
        %v1502 = vadd.f32 %v1278, %v1501
        %v1503 = vpop.f32.mrb[0].mxu0
        %1504 = vmatprep.mubr.f32.mxu0 0.0
        %1505 = vmatmul.mubr.f32.gmra.mrb[0].mxu0 %v1379
        %v1506 = vpop.f32.mrb[0].mxu0
        %v1507 = vadd.f32 %v1283, %v1506
        %v1508 = vpop.f32.mrb[0].mxu0
        %1509 = vmatprep.mubr.f32.mxu0 0.0
        %1510 = vmatmul.mubr.f32.gmra.mrb[0].mxu0 %v1382
        %v1511 = vpop.f32.mrb[0].mxu0
        %v1512 = vadd.f32 %v1288, %v1511
        %v1513 = vpop.f32.mrb[0].mxu0
        %1514 = vmatprep.mubr.f32.mxu0 0.0
        %1515 = vmatmul.mubr.f32.gmra.mrb[0].mxu0 %v1385
        %v1516 = vpop.f32.mrb[0].mxu0
        %v1517 = vadd.f32 %v1293, %v1516
        %v1518 = vpop.f32.mrb[0].mxu0
        %1519 = vmatprep.mubr.f32.mxu0 0.0
        %1520 = vmatmul.mubr.f32.gmra.mrb[0].mxu0 %v1388
        %v1521 = vpop.f32.mrb[0].mxu0
        %v1522 = vadd.f32 %v1298, %v1521
        %v1523 = vpop.f32.mrb[0].mxu0
        %1524 = vmatprep.mubr.f32.mxu0 0.0
        %1525 = vmatmul.mubr.f32.gmra.mrb[0].mxu0 %v1391
        %v1526 = vpop.f32.mrb[0].mxu0
        %v1527 = vadd.f32 %v1303, %v1526
        %v1528 = vpop.f32.mrb[0].mxu0
        %1529 = vmatprep.mubr.f32.mxu0 0.0
        %1530 = vmatmul.mubr.f32.gmra.mrb[0].mxu0 %v1394
        %v1531 = vpop.f32.mrb[0].mxu0
        %v1532 = vadd.f32 %v1308, %v1531
        %v1533 = vpop.f32.mrb[0].mxu0
        %1534 = vmatprep.mubr.f32.mxu0 0.0
        %1535 = vmatmul.mubr.f32.gmra.mrb[0].mxu0 %v1397
        %v1536 = vpop.f32.mrb[0].mxu0
        %v1537 = vadd.f32 %v1313, %v1536
        %v1538 = vpop.f32.mrb[0].mxu0
        %1539 = vmatprep.mubr.f32.mxu0 0.0
        %1540 = vmatmul.mubr.f32.gmra.mrb[0].mxu0 %v1400
        %v1541 = vpop.f32.mrb[0].mxu0
        %v1542 = vadd.f32 %v1318, %v1541
        %v1543 = vpop.f32.mrb[0].mxu0
        %1544 = vmatprep.mubr.f32.mxu0 0.0
        %1545 = vmatmul.mubr.f32.gmra.mrb[0].mxu0 %v1403
        %v1546 = vpop.f32.mrb[0].mxu0
        %v1547 = vadd.f32 %v1323, %v1546
        %v1548 = vpop.f32.mrb[0].mxu0
        %1549 = vmatprep.mubr.f32.mxu0 0.0
        %1550 = vmatmul.mubr.f32.gmra.mrb[0].mxu0 %v1406
        %v1551 = vpop.f32.mrb[0].mxu0
        %v1552 = vadd.f32 %v1328, %v1551
        %v1553 = vpop.f32.mrb[0].mxu0
        %1554 = vmatprep.mubr.f32.mxu0 0.0
        %1555 = vmatmul.mubr.f32.gmra.mrb[0].mxu0 %v1409
        %v1556 = vpop.f32.mrb[0].mxu0
        %v1557 = vadd.f32 %v1333, %v1556
        %v1558 = vpop.f32.mrb[0].mxu0
        %1559 = vmatprep.mubr.f32.mxu0 0.0
        %1560 = vmatmul.mubr.f32.gmra.mrb[0].mxu0 %v1412
        %v1561 = vpop.f32.mrb[0].mxu0
        %v1562 = vadd.f32 %v1338, %v1561
        %v1563 = vpop.f32.mrb[0].mxu0
        %1564 = vmatprep.mubr.f32.mxu0 0.0
        %1565 = vmatmul.mubr.f32.gmra.mrb[0].mxu0 %v1415
        %v1566 = vpop.f32.mrb[0].mxu0
        %v1567 = vadd.f32 %v1343, %v1566
        %v1568 = vpop.f32.mrb[0].mxu0
        %1569 = vmatprep.mubr.f32.mxu0 0.0
        %1570 = vmatmul.mubr.f32.gmra.mrb[0].mxu0 %v1418
        %v1571 = vpop.f32.mrb[0].mxu0
        %v1572 = vadd.f32 %v1348, %v1571
        %v1573 = vpop.f32.mrb[0].mxu0
        %1574 = vmatprep.mubr.f32.mxu0 0.0
        %1575 = vmatmul.mubr.f32.gmra.mrb[0].mxu0 %v1421
        %v1576 = vpop.f32.mrb[0].mxu0
        %v1577 = vadd.f32 %v1353, %v1576
        %v1578 = vpop.f32.mrb[0].mxu0
        %1579 = vmatprep.mubr.f32.mxu0 0.0
        %1580 = vmatmul.mubr.f32.gmra.mrb[0].mxu0 %v1424
        %v1581 = vpop.f32.mrb[0].mxu0
        %v1582 = vadd.f32 %v1358, %v1581
        %v1583 = vpop.f32.mrb[0].mxu0
        %1584 = vmatprep.mubr.f32.mxu0 0.0
        %1585 = vmatmul.mubr.f32.gmra.mrb[0].mxu0 %v1427
        %v1586 = vpop.f32.mrb[0].mxu0
        %v1587 = vadd.f32 %v1363, %v1586
        %v1588 = vpop.f32.mrb[0].mxu0
        %1589 = vmatprep.mubr.f32.mxu0 0.0
        %1590 = vmatmul.mubr.f32.gmra.mrb[0].mxu0 %v1430
        %v1591 = vpop.f32.mrb[0].mxu0
        %v1592 = vadd.f32 %v1368, %v1591
        %v1593 = vpop.f32.mrb[0].mxu0
        %1594 = vmatprep.mubr.f32.mxu0 0.0
        %1595 = vmatmul.mubr.f32.gmra.mrb[0].mxu0 %v1433
        %v1596 = vpop.f32.mrb[0].mxu0
        %v1597 = vadd.f32 %v1373, %v1596
        %v1598 = vpop.f32.mrb[0].mxu0
        %1599 = vdwg.mxu0
        %v1600 = vld [vmem:[#allocation7] sm:$0xff]
        %v1601 = vld [vmem:[#allocation7 + $0x8] sm:$0xff]
        %v1602 = vld [vmem:[#allocation7 + $0x10] sm:$0xff]
        %v1603 = vld [vmem:[#allocation7 + $0x18] sm:$0xff]
        %v1604 = vld [vmem:[#allocation7 + $0x20] sm:$0xff]
        %v1605 = vld [vmem:[#allocation7 + $0x28] sm:$0xff]
        %v1606 = vld [vmem:[#allocation7 + $0x30] sm:$0xff]
        %v1607 = vld [vmem:[#allocation7 + $0x38] sm:$0xff]
        %v1608 = vld [vmem:[#allocation7 + $0x40] sm:$0xff]
        %v1609 = vld [vmem:[#allocation7 + $0x48] sm:$0xff]
        %v1610 = vmul.f32 %v831, %v1127
        %v1611 = vmul.f32 %v836, %v1132
        %v1612 = vmul.f32 %v841, %v1137
        %v1613 = vmul.f32 %v846, %v1142
        %v1614 = vmul.f32 %v831, %v1147
        %v1615 = vmul.f32 %v836, %v1152
        %v1616 = vmul.f32 %v841, %v1157
        %v1617 = vmul.f32 %v846, %v1162
        %v1618 = vmul.f32 %v831, %v1167
        %v1619 = vmul.f32 %v836, %v1172
        %v1620 = vmul.f32 %v841, %v1177
        %v1621 = vmul.f32 %v846, %v1182
        %v1622 = vmul.f32 %v831, %v1187
        %v1623 = vmul.f32 %v836, %v1192
        %v1624 = vmul.f32 %v841, %v1197
        %v1625 = vmul.f32 %v846, %v1202
        %v1626 = vmul.f32 %v831, %v1207
        %v1627 = vmul.f32 %v836, %v1212
        %v1628 = vmul.f32 %v841, %v1217
        %v1629 = vmul.f32 %v846, %v1222
        %vm1630 = vcmask 261120
        %v1632 = vsel %vm1630, %v1601, 0
        %v1635 = vsel %vm1630, %v1603, 0
        %v1638 = vsel %vm1630, %v1605, 0
        %v1641 = vsel %vm1630, %v1607, 0
        %v1644 = vsel %vm1630, %v1609, 0
        %1646 = vmatprep.subr.mxu0 0.0
        %1647 = vmatpush1.msra.mxu0 %v1610
        %1648 = vmatprep.subr.mxu0 0.0
        %1649 = vmatpush1.msra.mxu0 %v1611
        %1650 = vmatprep.subr.mxu0 0.0
        %1651 = vmatpush1.msra.mxu0 %v1612
        %1652 = vmatprep.subr.mxu0 0.0
        %1653 = vmatpush1.msra.mxu0 %v1613
        %1654 = vmatprep.subr.mxu0 0.0
        %1655 = vmatpush1.msra.mxu0 %v1614
        %1656 = vmatprep.subr.mxu0 0.0
        %1657 = vmatpush1.msra.mxu0 %v1615
        %1658 = vmatprep.subr.mxu0 0.0
        %1659 = vmatpush1.msra.mxu0 %v1616
        %1660 = vmatprep.subr.mxu0 0.0
        %1661 = vmatpush1.msra.mxu0 %v1617
        %1662 = vmatprep.subr.mxu0 0.0
        %1663 = vmatpush1.msra.mxu0 %v1618
        %1664 = vmatprep.subr.mxu0 0.0
        %1665 = vmatpush1.msra.mxu0 %v1619
        %1666 = vmatprep.subr.mxu0 0.0
        %1667 = vmatpush1.msra.mxu0 %v1620
        %1668 = vmatprep.subr.mxu0 0.0
        %1669 = vmatpush1.msra.mxu0 %v1621
        %1670 = vmatprep.subr.mxu0 0.0
        %1671 = vmatpush1.msra.mxu0 %v1622
        %1672 = vmatprep.subr.mxu0 0.0
        %1673 = vmatpush1.msra.mxu0 %v1623
        %1674 = vmatprep.subr.mxu0 0.0
        %1675 = vmatpush1.msra.mxu0 %v1624
        %1676 = vmatprep.subr.mxu0 0.0
        %1677 = vmatpush1.msra.mxu0 %v1625
        %1678 = vmatprep.subr.mxu0 0.0
        %1679 = vmatpush1.msra.mxu0 %v1626
        %1680 = vmatprep.subr.mxu0 0.0
        %1681 = vmatpush1.msra.mxu0 %v1627
        %1682 = vmatprep.subr.mxu0 0.0
        %1683 = vmatpush1.msra.mxu0 %v1628
        %1684 = vmatprep.subr.mxu0 0.0
        %1685 = vmatpush1.msra.mxu0 %v1629
        %1686 = vmatprep.subr.mxu0 0.0
        %1687 = vmatpush1.msra.mxu0 0.0
        %1688 = vmatprep.subr.mxu0 0.0
        %1689 = vmatpush1.msra.mxu0 0.0
        %1690 = vmatprep.subr.mxu0 0.0
        %1691 = vmatpush1.msra.mxu0 0.0
        %1692 = vmatprep.subr.mxu0 0.0
        %1693 = vmatpush1.msra.mxu0 0.0
        %1694 = vmatprep.subr.mxu0 0.0
        %1695 = vmatpush1.msra.mxu0 0.0
        %1696 = vmatprep.subr.mxu0 0.0
        %1697 = vmatpush1.msra.mxu0 0.0
        %1698 = vmatprep.subr.mxu0 0.0
        %1699 = vmatpush1.msra.mxu0 0.0
        %1700 = vmatprep.subr.mxu0 0.0
        %1701 = vmatpush1.msra.mxu0 0.0
        %1702 = vmatprep.subr.mxu0 0.0
        %1703 = vmatpush1.msra.mxu0 0.0
        %1704 = vmatprep.subr.mxu0 0.0
        %1705 = vmatpush1.msra.mxu0 0.0
        %1706 = vmatprep.subr.mxu0 0.0
        %1707 = vmatpush1.msra.mxu0 0.0
        %1708 = vmatprep.subr.mxu0 0.0
        %1709 = vmatpush1.msra.mxu0 0.0
        %1710 = vmatprep.mubr.f32.mxu0 %v1632
        %1711 = vmatmul.mubr.f32.gmra.mrb[0].mxu0 %v1600
        %v1712 = vpop.f32.mrb[0].mxu0
        %v1713 = vadd.f32 0.0, %v1712
        %v1714 = vpop.f32.mrb[0].mxu0
        %1715 = vmatprep.mubr.f32.mxu0 %v1635
        %1716 = vmatmul.mubr.f32.gmra.mrb[0].mxu0 %v1602
        %v1717 = vpop.f32.mrb[0].mxu0
        %v1718 = vadd.f32 0.0, %v1717
        %v1719 = vpop.f32.mrb[0].mxu0
        %1720 = vmatprep.mubr.f32.mxu0 %v1638
        %1721 = vmatmul.mubr.f32.gmra.mrb[0].mxu0 %v1604
        %v1722 = vpop.f32.mrb[0].mxu0
        %v1723 = vadd.f32 0.0, %v1722
        %v1724 = vpop.f32.mrb[0].mxu0
        %1725 = vmatprep.mubr.f32.mxu0 %v1641
        %1726 = vmatmul.mubr.f32.gmra.mrb[0].mxu0 %v1606
        %v1727 = vpop.f32.mrb[0].mxu0
        %v1728 = vadd.f32 0.0, %v1727
        %v1729 = vpop.f32.mrb[0].mxu0
        %1730 = vmatprep.mubr.f32.mxu0 %v1644
        %1731 = vmatmul.mubr.f32.gmra.mrb[0].mxu0 %v1608
        %v1732 = vpop.f32.mrb[0].mxu0
        %v1733 = vadd.f32 0.0, %v1732
        %v1734 = vpop.f32.mrb[0].mxu0
        %1735 = vdwg.mxu0
        %v1736 = vmax.f32 %v1713, %v1718
        %v1737 = vmax.f32 %v1736, %v1723
        %v1738 = vmax.f32 %v1737, %v1728
        %v1739 = vmax.f32 %v1738, %v1733
        %v1740 = vsub.f32 %v1713, %v1739
        %v1741 = vmul.f32 %v1740, 1.442695
        %v1742 = vpow.pop %v1741
        %v1743 = vsub.f32 %v1718, %v1739
        %v1744 = vmul.f32 %v1743, 1.442695
        %v1745 = vpow.pop %v1744
        %v1746 = vsub.f32 %v1723, %v1739
        %v1747 = vmul.f32 %v1746, 1.442695
        %v1748 = vpow.pop %v1747
        %v1749 = vsub.f32 %v1728, %v1739
        %v1750 = vmul.f32 %v1749, 1.442695
        %v1751 = vpow.pop %v1750
        %v1752 = vsub.f32 %v1733, %v1739
        %v1753 = vmul.f32 %v1752, 1.442695
        %v1754 = vpow.pop %v1753
        %v1755 = vadd.f32 %v1742, %v1745
        %v1756 = vadd.f32 %v1755, %v1748
        %v1757 = vadd.f32 %v1756, %v1751
        %v1758 = vadd.f32 %v1757, %v1754
        %v1759 = vrcp.pop %v1758
        %v1760 = vmul.f32 1.0, %v1759
        %v1761 = vmul.f32 %v1742, %v1760
        %v1762 = vmul.f32 %v1745, %v1760
        %v1763 = vmul.f32 %v1748, %v1760
        %v1764 = vmul.f32 %v1751, %v1760
        %v1765 = vmul.f32 %v1754, %v1760
        %v1766 = vld [vmem:[%s10] sm:$0xff]
        %v1767 = vld [vmem:[%s10 + $0x8] sm:$0xff]
        %v1768 = vld [vmem:[%s10 + $0x10] sm:$0xff]
        %v1769 = vld [vmem:[%s10 + $0x18] sm:$0xff]
        %v1770 = vld [vmem:[%s10 + $0x20] sm:$0xff]
        %v1771 = vld [vmem:[%s10 + $0x28] sm:$0xff]
        %v1772 = vld [vmem:[%s10 + $0x30] sm:$0xff]
        %v1773 = vld [vmem:[%s10 + $0x38] sm:$0xff]
        %v1774 = vld [vmem:[%s10 + $0x40] sm:$0xff]
        %v1775 = vld [vmem:[%s10 + $0x48] sm:$0xff]
        %v1776 = vld [vmem:[%s10 + $0x50] sm:$0xff]
        %v1777 = vld [vmem:[%s10 + $0x58] sm:$0xff]
        %v1778 = vld [vmem:[%s10 + $0x60] sm:$0xff]
        %v1779 = vld [vmem:[%s10 + $0x68] sm:$0xff]
        %v1780 = vld [vmem:[%s10 + $0x70] sm:$0xff]
        %v1781 = vld [vmem:[%s10 + $0x78] sm:$0xff]
        %v1782 = vld [vmem:[%s10 + $0x80] sm:$0xff]
        %v1783 = vld [vmem:[%s10 + $0x88] sm:$0xff]
        %v1784 = vld [vmem:[%s10 + $0x90] sm:$0xff]
        %v1785 = vld [vmem:[%s10 + $0x98] sm:$0xff]
        %vm1786 = vcmask 326656
        %v1788 = vsel %vm1786, %v1766, 0
        %v1791 = vsel %vm1786, %v1767, 0
        %v1794 = vsel %vm1786, %v1768, 0
        %v1797 = vsel %vm1786, %v1769, 0
        %v1800 = vsel %vm1786, %v1770, 0
        %v1803 = vsel %vm1786, %v1771, 0
        %v1806 = vsel %vm1786, %v1772, 0
        %v1809 = vsel %vm1786, %v1773, 0
        %v1812 = vsel %vm1786, %v1774, 0
        %v1815 = vsel %vm1786, %v1775, 0
        %v1818 = vsel %vm1786, %v1776, 0
        %v1821 = vsel %vm1786, %v1777, 0
        %v1824 = vsel %vm1786, %v1778, 0
        %v1827 = vsel %vm1786, %v1779, 0
        %v1830 = vsel %vm1786, %v1780, 0
        %v1833 = vsel %vm1786, %v1781, 0
        %v1836 = vsel %vm1786, %v1782, 0
        %v1839 = vsel %vm1786, %v1783, 0
        %v1842 = vsel %vm1786, %v1784, 0
        %v1845 = vsel %vm1786, %v1785, 0
        %1847 = vmatprep.subr.mxu0 0.0
        %1848 = vmatpush1.msra.mxu0 %v1761
        %1849 = vmatprep.subr.mxu0 0.0
        %1850 = vmatpush1.msra.mxu0 %v1762
        %1851 = vmatprep.subr.mxu0 0.0
        %1852 = vmatpush1.msra.mxu0 %v1763
        %1853 = vmatprep.subr.mxu0 0.0
        %1854 = vmatpush1.msra.mxu0 %v1764
        %1855 = vmatprep.subr.mxu0 0.0
        %1856 = vmatpush1.msra.mxu0 %v1765
        %1857 = vmatprep.subr.mxu0 0.0
        %1858 = vmatpush1.msra.mxu0 0.0
        %1859 = vmatprep.subr.mxu0 0.0
        %1860 = vmatpush1.msra.mxu0 0.0
        %1861 = vmatprep.subr.mxu0 0.0
        %1862 = vmatpush1.msra.mxu0 0.0
        %1863 = vmatprep.subr.mxu0 0.0
        %1864 = vmatpush1.msra.mxu0 0.0
        %1865 = vmatprep.subr.mxu0 0.0
        %1866 = vmatpush1.msra.mxu0 0.0
        %1867 = vmatprep.subr.mxu0 0.0
        %1868 = vmatpush1.msra.mxu0 0.0
        %1869 = vmatprep.subr.mxu0 0.0
        %1870 = vmatpush1.msra.mxu0 0.0
        %1871 = vmatprep.subr.mxu0 0.0
        %1872 = vmatpush1.msra.mxu0 0.0
        %1873 = vmatprep.subr.mxu0 0.0
        %1874 = vmatpush1.msra.mxu0 0.0
        %1875 = vmatprep.subr.mxu0 0.0
        %1876 = vmatpush1.msra.mxu0 0.0
        %1877 = vmatprep.subr.mxu0 0.0
        %1878 = vmatpush1.msra.mxu0 0.0
        %1879 = vmatprep.subr.mxu0 0.0
        %1880 = vmatpush1.msra.mxu0 0.0
        %1881 = vmatprep.subr.mxu0 0.0
        %1882 = vmatpush1.msra.mxu0 0.0
        %1883 = vmatprep.subr.mxu0 0.0
        %1884 = vmatpush1.msra.mxu0 0.0
        %1885 = vmatprep.subr.mxu0 0.0
        %1886 = vmatpush1.msra.mxu0 0.0
        %1887 = vmatprep.subr.mxu0 0.0
        %1888 = vmatpush1.msra.mxu0 0.0
        %1889 = vmatprep.subr.mxu0 0.0
        %1890 = vmatpush1.msra.mxu0 0.0
        %1891 = vmatprep.subr.mxu0 0.0
        %1892 = vmatpush1.msra.mxu0 0.0
        %1893 = vmatprep.subr.mxu0 0.0
        %1894 = vmatpush1.msra.mxu0 0.0
        %1895 = vmatprep.subr.mxu0 0.0
        %1896 = vmatpush1.msra.mxu0 0.0
        %1897 = vmatprep.subr.mxu0 0.0
        %1898 = vmatpush1.msra.mxu0 0.0
        %1899 = vmatprep.subr.mxu0 0.0
        %1900 = vmatpush1.msra.mxu0 0.0
        %1901 = vmatprep.subr.mxu0 0.0
        %1902 = vmatpush1.msra.mxu0 0.0
        %1903 = vmatprep.subr.mxu0 0.0
        %1904 = vmatpush1.msra.mxu0 0.0
        %1905 = vmatprep.subr.mxu0 0.0
        %1906 = vmatpush1.msra.mxu0 0.0
        %1907 = vmatprep.subr.mxu0 0.0
        %1908 = vmatpush1.msra.mxu0 0.0
        %1909 = vmatprep.subr.mxu0 0.0
        %1910 = vmatpush1.msra.mxu0 0.0
        %1911 = vmatprep.mubr.f32.mxu0 0.0
        %1912 = vmatmul.mubr.f32.gmra.mrb[0].mxu0 %v1788
        %v1913 = vpop.f32.mrb[0].mxu0
        %v1914 = vadd.f32 0.0, %v1913
        %v1915 = vpop.f32.mrb[0].mxu0
        %1916 = vmatprep.mubr.f32.mxu0 0.0
        %1917 = vmatmul.mubr.f32.gmra.mrb[0].mxu0 %v1791
        %v1918 = vpop.f32.mrb[0].mxu0
        %v1919 = vadd.f32 0.0, %v1918
        %v1920 = vpop.f32.mrb[0].mxu0
        %1921 = vmatprep.mubr.f32.mxu0 0.0
        %1922 = vmatmul.mubr.f32.gmra.mrb[0].mxu0 %v1794
        %v1923 = vpop.f32.mrb[0].mxu0
        %v1924 = vadd.f32 0.0, %v1923
        %v1925 = vpop.f32.mrb[0].mxu0
        %1926 = vmatprep.mubr.f32.mxu0 0.0
        %1927 = vmatmul.mubr.f32.gmra.mrb[0].mxu0 %v1797
        %v1928 = vpop.f32.mrb[0].mxu0
        %v1929 = vadd.f32 0.0, %v1928
        %v1930 = vpop.f32.mrb[0].mxu0
        %1931 = vmatprep.mubr.f32.mxu0 0.0
        %1932 = vmatmul.mubr.f32.gmra.mrb[0].mxu0 %v1800
        %v1933 = vpop.f32.mrb[0].mxu0
        %v1934 = vadd.f32 0.0, %v1933
        %v1935 = vpop.f32.mrb[0].mxu0
        %1936 = vmatprep.mubr.f32.mxu0 0.0
        %1937 = vmatmul.mubr.f32.gmra.mrb[0].mxu0 %v1803
        %v1938 = vpop.f32.mrb[0].mxu0
        %v1939 = vadd.f32 0.0, %v1938
        %v1940 = vpop.f32.mrb[0].mxu0
        %1941 = vmatprep.mubr.f32.mxu0 0.0
        %1942 = vmatmul.mubr.f32.gmra.mrb[0].mxu0 %v1806
        %v1943 = vpop.f32.mrb[0].mxu0
        %v1944 = vadd.f32 0.0, %v1943
        %v1945 = vpop.f32.mrb[0].mxu0
        %1946 = vmatprep.mubr.f32.mxu0 0.0
        %1947 = vmatmul.mubr.f32.gmra.mrb[0].mxu0 %v1809
        %v1948 = vpop.f32.mrb[0].mxu0
        %v1949 = vadd.f32 0.0, %v1948
        %v1950 = vpop.f32.mrb[0].mxu0
        %1951 = vmatprep.mubr.f32.mxu0 0.0
        %1952 = vmatmul.mubr.f32.gmra.mrb[0].mxu0 %v1812
        %v1953 = vpop.f32.mrb[0].mxu0
        %v1954 = vadd.f32 0.0, %v1953
        %v1955 = vpop.f32.mrb[0].mxu0
        %1956 = vmatprep.mubr.f32.mxu0 0.0
        %1957 = vmatmul.mubr.f32.gmra.mrb[0].mxu0 %v1815
        %v1958 = vpop.f32.mrb[0].mxu0
        %v1959 = vadd.f32 0.0, %v1958
        %v1960 = vpop.f32.mrb[0].mxu0
        %1961 = vmatprep.mubr.f32.mxu0 0.0
        %1962 = vmatmul.mubr.f32.gmra.mrb[0].mxu0 %v1818
        %v1963 = vpop.f32.mrb[0].mxu0
        %v1964 = vadd.f32 0.0, %v1963
        %v1965 = vpop.f32.mrb[0].mxu0
        %1966 = vmatprep.mubr.f32.mxu0 0.0
        %1967 = vmatmul.mubr.f32.gmra.mrb[0].mxu0 %v1821
        %v1968 = vpop.f32.mrb[0].mxu0
        %v1969 = vadd.f32 0.0, %v1968
        %v1970 = vpop.f32.mrb[0].mxu0
        %1971 = vmatprep.mubr.f32.mxu0 0.0
        %1972 = vmatmul.mubr.f32.gmra.mrb[0].mxu0 %v1824
        %v1973 = vpop.f32.mrb[0].mxu0
        %v1974 = vadd.f32 0.0, %v1973
        %v1975 = vpop.f32.mrb[0].mxu0
        %1976 = vmatprep.mubr.f32.mxu0 0.0
        %1977 = vmatmul.mubr.f32.gmra.mrb[0].mxu0 %v1827
        %v1978 = vpop.f32.mrb[0].mxu0
        %v1979 = vadd.f32 0.0, %v1978
        %v1980 = vpop.f32.mrb[0].mxu0
        %1981 = vmatprep.mubr.f32.mxu0 0.0
        %1982 = vmatmul.mubr.f32.gmra.mrb[0].mxu0 %v1830
        %v1983 = vpop.f32.mrb[0].mxu0
        %v1984 = vadd.f32 0.0, %v1983
        %v1985 = vpop.f32.mrb[0].mxu0
        %1986 = vmatprep.mubr.f32.mxu0 0.0
        %1987 = vmatmul.mubr.f32.gmra.mrb[0].mxu0 %v1833
        %v1988 = vpop.f32.mrb[0].mxu0
        %v1989 = vadd.f32 0.0, %v1988
        %v1990 = vpop.f32.mrb[0].mxu0
        %1991 = vmatprep.mubr.f32.mxu0 0.0
        %1992 = vmatmul.mubr.f32.gmra.mrb[0].mxu0 %v1836
        %v1993 = vpop.f32.mrb[0].mxu0
        %v1994 = vadd.f32 0.0, %v1993
        %v1995 = vpop.f32.mrb[0].mxu0
        %1996 = vmatprep.mubr.f32.mxu0 0.0
        %1997 = vmatmul.mubr.f32.gmra.mrb[0].mxu0 %v1839
        %v1998 = vpop.f32.mrb[0].mxu0
        %v1999 = vadd.f32 0.0, %v1998
        %v2000 = vpop.f32.mrb[0].mxu0
        %2001 = vmatprep.mubr.f32.mxu0 0.0
        %2002 = vmatmul.mubr.f32.gmra.mrb[0].mxu0 %v1842
        %v2003 = vpop.f32.mrb[0].mxu0
        %v2004 = vadd.f32 0.0, %v2003
        %v2005 = vpop.f32.mrb[0].mxu0
        %2006 = vmatprep.mubr.f32.mxu0 0.0
        %2007 = vmatmul.mubr.f32.gmra.mrb[0].mxu0 %v1845
        %v2008 = vpop.f32.mrb[0].mxu0
        %v2009 = vadd.f32 0.0, %v2008
        %v2010 = vpop.f32.mrb[0].mxu0
        %2011 = vdwg.mxu0
        %v2012 = vmul.f32 %v1914, %v1502
        %v2013 = vmul.f32 %v1919, %v1507
        %v2014 = vmul.f32 %v1924, %v1512
        %v2015 = vmul.f32 %v1929, %v1517
        %v2016 = vmul.f32 %v1934, %v1522
        %v2017 = vmul.f32 %v1939, %v1527
        %v2018 = vmul.f32 %v1944, %v1532
        %v2019 = vmul.f32 %v1949, %v1537
        %v2020 = vmul.f32 %v1954, %v1542
        %v2021 = vmul.f32 %v1959, %v1547
        %v2022 = vmul.f32 %v1964, %v1552
        %v2023 = vmul.f32 %v1969, %v1557
        %v2024 = vmul.f32 %v1974, %v1562
        %v2025 = vmul.f32 %v1979, %v1567
        %v2026 = vmul.f32 %v1984, %v1572
        %v2027 = vmul.f32 %v1989, %v1577
        %v2028 = vmul.f32 %v1994, %v1582
        %v2029 = vmul.f32 %v1999, %v1587
        %v2030 = vmul.f32 %v2004, %v1592
        %v2031 = vmul.f32 %v2009, %v1597
        %v2032 = vadd.f32 %v2012, %v2016
        %v2033 = vadd.f32 %v2013, %v2017
        %v2034 = vadd.f32 %v2014, %v2018
        %v2035 = vadd.f32 %v2015, %v2019
        %v2036 = vadd.f32 %v2032, %v2020
        %v2037 = vadd.f32 %v2033, %v2021
        %v2038 = vadd.f32 %v2034, %v2022
        %v2039 = vadd.f32 %v2035, %v2023
        %v2040 = vadd.f32 %v2036, %v2024
        %v2041 = vadd.f32 %v2037, %v2025
        %v2042 = vadd.f32 %v2038, %v2026
        %v2043 = vadd.f32 %v2039, %v2027
        %v2044 = vadd.f32 %v2040, %v2028
        %v2045 = vadd.f32 %v2041, %v2029
        %v2046 = vadd.f32 %v2042, %v2030
        %v2047 = vadd.f32 %v2043, %v2031
        %v2048 = vld [vmem:[#allocation9] sm:$0xff]
        %v2049 = vld [vmem:[#allocation9 + $0x8] sm:$0xff]
        %v2050 = vld [vmem:[#allocation9 + $0x10] sm:$0xff]
        %v2051 = vld [vmem:[#allocation9 + $0x18] sm:$0xff]
        %v2052 = vld [vmem:[%s12] sm:$0xff]
        %v2053 = vld [vmem:[%s12 + $0x8] sm:$0xff]
        %v2054 = vld [vmem:[%s12 + $0x10] sm:$0xff]
        %v2055 = vld [vmem:[%s12 + $0x18] sm:$0xff]
        %2057 = vset.pattern.permute.xlu0 0
        %2058 = vperm.xlu0 %2057, %v2052
        %v2059 = vpop.permute.xlu0 %2058
        %2062 = vset.pattern.permute.xlu0 0
        %2063 = vperm.xlu0 %2062, %v2053
        %v2064 = vpop.permute.xlu0 %2063
        %2067 = vset.pattern.permute.xlu0 0
        %2068 = vperm.xlu0 %2067, %v2054
        %v2069 = vpop.permute.xlu0 %2068
        %2072 = vset.pattern.permute.xlu0 0
        %2073 = vperm.xlu0 %2072, %v2055
        %v2074 = vpop.permute.xlu0 %2073
        %v2077 = vsel %vm1630, %v2048, 0
        %v2080 = vsel %vm1630, %v2049, 0
        %v2083 = vsel %vm1630, %v2050, 0
        %v2086 = vsel %vm1630, %v2051, 0
        %2088 = vmatprep.subr.mxu0 0.0
        %2089 = vmatpush1.msra.mxu0 %v2044
        %2090 = vmatprep.subr.mxu0 0.0
        %2091 = vmatpush1.msra.mxu0 %v2045
        %2092 = vmatprep.subr.mxu0 0.0
        %2093 = vmatpush1.msra.mxu0 %v2046
        %2094 = vmatprep.subr.mxu0 0.0
        %2095 = vmatpush1.msra.mxu0 %v2047
        %2096 = vmatprep.subr.mxu0 0.0
        %2097 = vmatpush1.msra.mxu0 0.0
        %2098 = vmatprep.subr.mxu0 0.0
        %2099 = vmatpush1.msra.mxu0 0.0
        %2100 = vmatprep.subr.mxu0 0.0
        %2101 = vmatpush1.msra.mxu0 0.0
        %2102 = vmatprep.subr.mxu0 0.0
        %2103 = vmatpush1.msra.mxu0 0.0
        %2104 = vmatprep.subr.mxu0 0.0
        %2105 = vmatpush1.msra.mxu0 0.0
        %2106 = vmatprep.subr.mxu0 0.0
        %2107 = vmatpush1.msra.mxu0 0.0
        %2108 = vmatprep.subr.mxu0 0.0
        %2109 = vmatpush1.msra.mxu0 0.0
        %2110 = vmatprep.subr.mxu0 0.0
        %2111 = vmatpush1.msra.mxu0 0.0
        %2112 = vmatprep.subr.mxu0 0.0
        %2113 = vmatpush1.msra.mxu0 0.0
        %2114 = vmatprep.subr.mxu0 0.0
        %2115 = vmatpush1.msra.mxu0 0.0
        %2116 = vmatprep.subr.mxu0 0.0
        %2117 = vmatpush1.msra.mxu0 0.0
        %2118 = vmatprep.subr.mxu0 0.0
        %2119 = vmatpush1.msra.mxu0 0.0
        %2120 = vmatprep.subr.mxu0 0.0
        %2121 = vmatpush1.msra.mxu0 0.0
        %2122 = vmatprep.subr.mxu0 0.0
        %2123 = vmatpush1.msra.mxu0 0.0
        %2124 = vmatprep.subr.mxu0 0.0
        %2125 = vmatpush1.msra.mxu0 0.0
        %2126 = vmatprep.subr.mxu0 0.0
        %2127 = vmatpush1.msra.mxu0 0.0
        %2128 = vmatprep.subr.mxu0 0.0
        %2129 = vmatpush1.msra.mxu0 0.0
        %2130 = vmatprep.subr.mxu0 0.0
        %2131 = vmatpush1.msra.mxu0 0.0
        %2132 = vmatprep.subr.mxu0 0.0
        %2133 = vmatpush1.msra.mxu0 0.0
        %2134 = vmatprep.subr.mxu0 0.0
        %2135 = vmatpush1.msra.mxu0 0.0
        %2136 = vmatprep.subr.mxu0 0.0
        %2137 = vmatpush1.msra.mxu0 0.0
        %2138 = vmatprep.subr.mxu0 0.0
        %2139 = vmatpush1.msra.mxu0 0.0
        %2140 = vmatprep.subr.mxu0 0.0
        %2141 = vmatpush1.msra.mxu0 0.0
        %2142 = vmatprep.subr.mxu0 0.0
        %2143 = vmatpush1.msra.mxu0 0.0
        %2144 = vmatprep.subr.mxu0 0.0
        %2145 = vmatpush1.msra.mxu0 0.0
        %2146 = vmatprep.subr.mxu0 0.0
        %2147 = vmatpush1.msra.mxu0 0.0
        %2148 = vmatprep.subr.mxu0 0.0
        %2149 = vmatpush1.msra.mxu0 0.0
        %2150 = vmatprep.subr.mxu0 0.0
        %2151 = vmatpush1.msra.mxu0 0.0
        %2152 = vmatprep.mubr.f32.mxu0 0.0
        %2153 = vmatmul.mubr.f32.gmra.mrb[0].mxu0 %v2077
        %v2154 = vpop.f32.mrb[0].mxu0
        %v2155 = vadd.f32 %v2059, %v2154
        %v2156 = vpop.f32.mrb[0].mxu0
        %2157 = vmatprep.mubr.f32.mxu0 0.0
        %2158 = vmatmul.mubr.f32.gmra.mrb[0].mxu0 %v2080
        %v2159 = vpop.f32.mrb[0].mxu0
        %v2160 = vadd.f32 %v2064, %v2159
        %v2161 = vpop.f32.mrb[0].mxu0
        %2162 = vmatprep.mubr.f32.mxu0 0.0
        %2163 = vmatmul.mubr.f32.gmra.mrb[0].mxu0 %v2083
        %v2164 = vpop.f32.mrb[0].mxu0
        %v2165 = vadd.f32 %v2069, %v2164
        %v2166 = vpop.f32.mrb[0].mxu0
        %2167 = vmatprep.mubr.f32.mxu0 0.0
        %2168 = vmatmul.mubr.f32.gmra.mrb[0].mxu0 %v2086
        %v2169 = vpop.f32.mrb[0].mxu0
        %v2170 = vadd.f32 %v2074, %v2169
        %v2171 = vpop.f32.mrb[0].mxu0
        %2172 = vdwg.mxu0
        %vm2173 = vcmp.ge.f32.partialorder %v2155, 0.0
        %vm2174 = vcmp.ge.f32.partialorder %v2160, 0.0
        %vm2175 = vcmp.ge.f32.partialorder %v2165, 0.0
        %vm2176 = vcmp.ge.f32.partialorder %v2170, 0.0
        %v2177 = vmul.f32 %v2155, 0.01
        %v2178 = vmul.f32 %v2160, 0.01
        %v2179 = vmul.f32 %v2165, 0.01
        %v2180 = vmul.f32 %v2170, 0.01
        %v2181 = vsel %vm2173, %v2155, %v2177
        %v2182 = vsel %vm2174, %v2160, %v2178
        %v2183 = vsel %vm2175, %v2165, %v2179
        %v2184 = vsel %vm2176, %v2170, %v2180
        %v2185 = vld [vmem:[%s13] sm:$0xff]
        %v2186 = vld [vmem:[%s14] sm:$0xff]
        %2188 = vset.pattern.permute.xlu0 0
        %2189 = vperm.xlu0 %2188, %v2186
        %v2190 = vpop.permute.xlu0 %2189
        %v2193 = vsel %vm1630, %v2185, 0
        %2195 = vmatprep.subr.mxu0 0.0
        %2196 = vmatpush1.msra.mxu0 %v2181
        %2197 = vmatprep.subr.mxu0 0.0
        %2198 = vmatpush1.msra.mxu0 %v2182
        %2199 = vmatprep.subr.mxu0 0.0
        %2200 = vmatpush1.msra.mxu0 %v2183
        %2201 = vmatprep.subr.mxu0 0.0
        %2202 = vmatpush1.msra.mxu0 %v2184
        %2203 = vmatprep.subr.mxu0 0.0
        %2204 = vmatpush1.msra.mxu0 0.0
        %2205 = vmatprep.subr.mxu0 0.0
        %2206 = vmatpush1.msra.mxu0 0.0
        %2207 = vmatprep.subr.mxu0 0.0
        %2208 = vmatpush1.msra.mxu0 0.0
        %2209 = vmatprep.subr.mxu0 0.0
        %2210 = vmatpush1.msra.mxu0 0.0
        %2211 = vmatprep.subr.mxu0 0.0
        %2212 = vmatpush1.msra.mxu0 0.0
        %2213 = vmatprep.subr.mxu0 0.0
        %2214 = vmatpush1.msra.mxu0 0.0
        %2215 = vmatprep.subr.mxu0 0.0
        %2216 = vmatpush1.msra.mxu0 0.0
        %2217 = vmatprep.subr.mxu0 0.0
        %2218 = vmatpush1.msra.mxu0 0.0
        %2219 = vmatprep.subr.mxu0 0.0
        %2220 = vmatpush1.msra.mxu0 0.0
        %2221 = vmatprep.subr.mxu0 0.0
        %2222 = vmatpush1.msra.mxu0 0.0
        %2223 = vmatprep.subr.mxu0 0.0
        %2224 = vmatpush1.msra.mxu0 0.0
        %2225 = vmatprep.subr.mxu0 0.0
        %2226 = vmatpush1.msra.mxu0 0.0
        %2227 = vmatprep.subr.mxu0 0.0
        %2228 = vmatpush1.msra.mxu0 0.0
        %2229 = vmatprep.subr.mxu0 0.0
        %2230 = vmatpush1.msra.mxu0 0.0
        %2231 = vmatprep.subr.mxu0 0.0
        %2232 = vmatpush1.msra.mxu0 0.0
        %2233 = vmatprep.subr.mxu0 0.0
        %2234 = vmatpush1.msra.mxu0 0.0
        %2235 = vmatprep.subr.mxu0 0.0
        %2236 = vmatpush1.msra.mxu0 0.0
        %2237 = vmatprep.subr.mxu0 0.0
        %2238 = vmatpush1.msra.mxu0 0.0
        %2239 = vmatprep.subr.mxu0 0.0
        %2240 = vmatpush1.msra.mxu0 0.0
        %2241 = vmatprep.subr.mxu0 0.0
        %2242 = vmatpush1.msra.mxu0 0.0
        %2243 = vmatprep.subr.mxu0 0.0
        %2244 = vmatpush1.msra.mxu0 0.0
        %2245 = vmatprep.subr.mxu0 0.0
        %2246 = vmatpush1.msra.mxu0 0.0
        %2247 = vmatprep.subr.mxu0 0.0
        %2248 = vmatpush1.msra.mxu0 0.0
        %2249 = vmatprep.subr.mxu0 0.0
        %2250 = vmatpush1.msra.mxu0 0.0
        %2251 = vmatprep.subr.mxu0 0.0
        %2252 = vmatpush1.msra.mxu0 0.0
        %2253 = vmatprep.subr.mxu0 0.0
        %2254 = vmatpush1.msra.mxu0 0.0
        %2255 = vmatprep.subr.mxu0 0.0
        %2256 = vmatpush1.msra.mxu0 0.0
        %2257 = vmatprep.subr.mxu0 0.0
        %2258 = vmatpush1.msra.mxu0 0.0
        %2259 = vmatprep.mubr.f32.mxu0 0.0
        %2260 = vmatmul.mubr.f32.gmra.mrb[0].mxu0 %v2193
        %v2261 = vpop.f32.mrb[0].mxu0
        %v2262 = vadd.f32 %v2190, %v2261
        %v2263 = vpop.f32.mrb[0].mxu0
        %2264 = vdwg.mxu0
        %2265 = vst [vmem:[%s720] sm:$0xff] %v2262
        %s2266 = sand.u32 %s371, 1
        %s2267 = scalar_lea.sflag [#allocation4], %s2266
        %s2268 = sand.u32 %s371, 1
        %s2269 = smul.addr %s2268, 8
        %s2270 = scalar_lea.vmem [#allocation10], %s2269
        // Predicated region
        $region169: #{tpu_custom_call.1} parent=147 // pred_check
          %p2271 = pneg %p381
        $region170: #{tpu_custom_call.1} parent=147 // pred_check_branch
          %2273 = sbr.rel (%p2271) target = $region172
        $region171: #{tpu_custom_call.1} parent=147 // pred_region
          %s2275 = ssub.s32 128, 128
          %2276 = vsyncadd %s2267, %s2275
          %s2277 = smul.addr %s33, 128
          %s2278 = scalar_lea.hbm %s15, %s2277
          %s2280 = sshll.u32 %s2270, 4
          %s2281 = int_to_ptr.vmem [resolvable:$true] %s2280
          %2283 = dma.vmem_to_hbm [thread:$0]  %s2281, 128, %s2278, %s2267
        $region172: #{tpu_custom_call.1} parent=147 // pred_fallthru
          _
      $region148: #{tpu_custom_call.1} parent=5 // pred_fallthru
        _
      %p2284 = scmp.le.s32.totalorder 2, %s28
      // Predicated region
      $region173: #{tpu_custom_call.1} parent=5 // pred_check
        %p2285 = pneg %p2284
      $region174: #{tpu_custom_call.1} parent=5 // pred_check_branch
        %2287 = sbr.rel (%p2285) target = $region176
      $region175: #{tpu_custom_call.1} parent=5 // pred_region
        %s2288 = ssub.s32 %s28, 2
        // Predicated region
        $region177: #{tpu_custom_call.1} parent=175 // pred_check
          %p2289 = pneg %p387
        $region178: #{tpu_custom_call.1} parent=175 // pred_check_branch
          %2291 = sbr.rel (%p2289) target = $region180
        $region179: #{tpu_custom_call.1} parent=175 // pred_region
          %s2292 = sand.u32 %s372, 1
          %s2293 = scalar_lea.sflag [#allocation4], %s2292
          %s2294 = sand.u32 %s372, 1
          %s2295 = smul.addr %s2294, 8
          %s2296 = scalar_lea.vmem [#allocation10], %s2295
          %2297 = dma.done %s2293, 128
        $region180: #{tpu_custom_call.1} parent=175 // pred_fallthru
          _
      $region176: #{tpu_custom_call.1} parent=5 // pred_fallthru
        _
    $region6: #{tpu_custom_call.1} parent=1 // loop_footer
      %s32 = sadd.s32 1, %s28
    $region7: #{tpu_custom_call.1} parent=1 // loop_footer_branch
      %27 = sbr.rel target = $region3
    $region8: #{tpu_custom_call.1} parent=1 // loop_exit
      _
    %2298 = vsyncpa [#allocation3], 1
    %s2299 = scalar_lea.sflag [#allocation3], 1
    %2300 = vsyncpa %s2299, 1
    %2301 = vsyncpa [#allocation8], 1
    %2302 = vsyncpa [#allocation4], 1
    %s2303 = scalar_lea.sflag [#allocation4], 1
    %2304 = vsyncpa %s2303, 1

</llo_original>
